<compile_context>
chip_gen: v7x
topology: tpu7x:2x2x1
jax: 0.10.0
libtpu: 0.0.40
codegen_flags: <defaults>
</compile_context>

<pallas_src>
import math
from functools import partial

import jax
import jax.numpy as jnp
from jax.experimental import pallas as pl
from jax.experimental.pallas import tpu as pltpu


# ----------------------------------------------------------------------------
# Fused kernel: one grid step handles a block of Bt batch elements.
# ----------------------------------------------------------------------------
def _action_scorer_kernel(num_heads, bt,
                          enc_ref, acm_ref, am_ref,
                          hog_ref, obsm_ref, hgo_ref,
                          wqkv_ref, bqkv_ref, wo_ref, bo_ref,
                          w1ac_ref, w1og_ref, b1_ref, w2_ref, b2_ref,
                          out_ref):
    nh = num_heads
    f32, bf16 = jnp.float32, jnp.bfloat16
    n = enc_ref.shape[1]
    h = enc_ref.shape[3]
    dh = h // nh

    # ---- 1) masked mean over action-candidate tokens: (Bt,N,L,H) -> (Bt,N,H) --
    x = enc_ref[...].astype(f32)                       # bf16 HBM stream -> f32 acc
    m = acm_ref[...]                                   # (Bt,N,L,1) f32
    num = jnp.sum(x * m, axis=2)                       # (Bt,N,H)
    den = jnp.maximum(jnp.sum(m, axis=2), 1.0)         # (Bt,N,1) guard padded cands
    acr = num * pl.reciprocal(den, approx=True)        # (Bt,N,H)

    # Hoisted weight loads (once per grid step).
    w_text = (wqkv_ref[0], bqkv_ref[0], wo_ref[0], bo_ref[0])
    w_graph = (wqkv_ref[1], bqkv_ref[1], wo_ref[1], bo_ref[1])
    w1og = w1og_ref[...]                               # (2H, H) bf16
    w1ac = w1ac_ref[...]                               # (H, H)  bf16

    def attn(x_bf, weights, key_bias):
        # x_bf: (S, H) bf16; key_bias: (1, S) f32 additive bias or None.
        wqkv, bqkv, wo, bo = weights
        # Fused QKV: one (S,H)@(H,3H) MXU matmul (scale folded into Q columns).
        qkv = jnp.dot(x_bf, wqkv, preferred_element_type=f32) + bqkv    # (S, 3H) f32
        outs = []
        for hd in range(nh):                            # small static head loop
            q_h = qkv[:, hd * dh:(hd + 1) * dh].astype(bf16)            # (S, dh)
            k_h = qkv[:, h + hd * dh: h + (hd + 1) * dh].astype(bf16)
            v_h = qkv[:, 2 * h + hd * dh: 2 * h + (hd + 1) * dh].astype(bf16)
            s = jnp.dot(q_h, k_h.T, preferred_element_type=f32)         # (S, S)
            if key_bias is not None:
                s = s + key_bias                        # additive -1e30 bias
            s = s - jnp.max(s, axis=-1, keepdims=True)
            e = jnp.exp(s)
            p = e / jnp.sum(e, axis=-1, keepdims=True)  # exact softmax normalization
            outs.append(jnp.dot(p.astype(bf16), v_h, preferred_element_type=f32))
        # Merge heads on lanes and do ONE K=H output projection.
        o = jnp.concatenate(outs, axis=-1).astype(bf16)                 # (S, H)
        return jnp.dot(o, wo, preferred_element_type=f32) + bo          # (S, H) f32

    # ---- 2) text/graph self-attention + pooling, per batch element -----------
    og_rows = []
    for b in range(bt):                                 # static, small unroll
        obs_m = obsm_ref[b]                             # (1, S_obs) f32
        key_bias = (obs_m - 1.0) * 1e30                 # 0 where valid, -1e30 else
        o_obs = attn(hog_ref[b], w_text, key_bias)      # (S_obs, H)
        pooled = jnp.dot(obs_m, o_obs, preferred_element_type=f32)      # (1, H)
        obs_den = jnp.sum(obs_m, axis=-1, keepdims=True)
        # No zero-guard here, matching the PyTorch reference (candidate path IS
        # guarded); a fully-masked obs sequence is undefined in the original too.
        obs_r = pooled * pl.reciprocal(obs_den, approx=True)            # (1, H)

        o_g = attn(hgo_ref[b], w_graph, None)           # (S_g, H)
        gr_r = jnp.mean(o_g, axis=0, keepdims=True)     # (1, H) (1/S_g is static)

        og = jnp.concatenate([obs_r, gr_r], axis=-1).astype(bf16)       # (1, 2H)
        og_rows.append(jnp.dot(og, w1og, preferred_element_type=f32))   # (1, H)
    og_bias = jnp.concatenate(og_rows, axis=0)          # (Bt, H)

    # ---- 3) scoring MLP: acr@(H,H) + per-batch obs/graph bias row ------------
    acr2 = acr.reshape(bt * n, h).astype(bf16)
    h1 = jnp.dot(acr2, w1ac, preferred_element_type=f32).reshape(bt, n, h)
    h1 = jnp.maximum(h1 + og_bias[:, None, :] + b1_ref[...], 0.0)       # (Bt,N,H)
    # H->1 projection as multiply + lane reduce; the action mask is folded in
    # exactly:  ((relu*am)@w2 + b2)*am  ==  (am*s_raw + b2)*am.
    s_raw = jnp.sum(h1 * w2_ref[...], axis=-1)          # (Bt, N)
    for b in range(bt):
        am_b = am_ref[b]                                # (1, N)
        out_ref[b] = (am_b * s_raw[b:b + 1, :] + b2_ref[...]) * am_b    # (1, N)


# ----------------------------------------------------------------------------
# Parameter re-packing: fused QKV (H,3H) with folded scale, flat Wo, split W1.
# ----------------------------------------------------------------------------
def _prepare_kernel_params(params, hidden_dim, num_heads):
    h = hidden_dim
    dh = h // num_heads
    scale = 1.0 / math.sqrt(dh)

    def pack_attn(attn):
        wq_t, wk_t, wv_t, bq, bk, bv, wo_t, bo = attn
        wqkv = jnp.concatenate([wq_t * scale, wk_t, wv_t], axis=1)        # (H, 3H)
        bqkv = jnp.concatenate([bq * scale, bk, bv]).reshape(1, 3 * h)    # (1, 3H)
        return wqkv, bqkv, wo_t, bo.reshape(1, h)

    t = pack_attn(params["attn_text"])
    g = pack_attn(params["attn_graph"])
    w1t = params["w1t"]                                                   # (3H, H)
    return {
        "wqkv": jnp.stack([t[0], g[0]]).astype(jnp.bfloat16),             # (2, H, 3H)
        "bqkv": jnp.stack([t[1], g[1]]).astype(jnp.float32),              # (2, 1, 3H)
        "wo":   jnp.stack([t[2], g[2]]).astype(jnp.bfloat16),             # (2, H, H)
        "bo":   jnp.stack([t[3], g[3]]).astype(jnp.float32),              # (2, 1, H)
        "w1ac": w1t[:h].astype(jnp.bfloat16),                             # (H, H)
        "w1og": w1t[h:].astype(jnp.bfloat16),                             # (2H, H)
        "b1":   params["b1"].reshape(1, h).astype(jnp.float32),
        "w2":   params["w2t"].reshape(1, h).astype(jnp.float32),
        "b2":   params["b2"].reshape(1, 1).astype(jnp.float32),
    }


def _pick_batch_tile(b):
    # Largest divisor of B (<= 8) that still leaves >= 2 grid steps so v7x's two
    # TensorCores both get work; on v5e/v6e bigger Bt just amortizes loop cost.
    best = 1
    for t in range(1, min(8, b) + 1):
        if b % t == 0 and (b // t >= 2 or b == 1):
            best = t
    return best


# ----------------------------------------------------------------------------
# ActionScorer forward: a single pallas_call, Bt batch elements per grid step.
# ----------------------------------------------------------------------------
def action_scorer_forward(enc_action_cands, action_cand_mask, action_mask,
                          h_og, h_go, obs_mask, params, num_heads):
    b, n, l, h = enc_action_cands.shape
    s_obs = h_og.shape[1]
    s_g = h_go.shape[1]
    bt = _pick_batch_tile(b)
    kp = _prepare_kernel_params(params, h, num_heads)

    # bf16 streams for the big tensors; masks pre-shaped so the kernel needs no
    # relayouts and every BlockSpec keeps full-extent last-two dims.
    enc_bf = enc_action_cands.astype(jnp.bfloat16)
    hog_bf = h_og.astype(jnp.bfloat16)
    hgo_bf = h_go.astype(jnp.bfloat16)
    acm = action_cand_mask.reshape(b, n, l, 1).astype(jnp.float32)
    am = action_mask.reshape(b, 1, n).astype(jnp.float32)
    obsm = obs_mask.reshape(b, 1, s_obs).astype(jnp.float32)

    kernel = partial(_action_scorer_kernel, num_heads, bt)
    # TODO(synk): for very large num_action_cands, additionally tile the N axis
    # (re-derive the Bt/N budget for v7x's 64 MiB VMEM vs v5e/v6e's 128 MiB).
    out = pl.pallas_call(
        kernel,
        out_shape=jax.ShapeDtypeStruct((b, 1, n), jnp.float32),
        grid=(b // bt,),
        in_specs=[
            pl.BlockSpec((bt, n, l, h), lambda i: (i, 0, 0, 0)),   # enc_action_cands
            pl.BlockSpec((bt, n, l, 1), lambda i: (i, 0, 0, 0)),   # action_cand_mask
            pl.BlockSpec((bt, 1, n), lambda i: (i, 0, 0)),         # action_mask
            pl.BlockSpec((bt, s_obs, h), lambda i: (i, 0, 0)),     # h_og
            pl.BlockSpec((bt, 1, s_obs), lambda i: (i, 0, 0)),     # obs_mask
            pl.BlockSpec((bt, s_g, h), lambda i: (i, 0, 0)),       # h_go
            pl.BlockSpec(kp["wqkv"].shape, lambda i: (0, 0, 0)),   # weights: constant
            pl.BlockSpec(kp["bqkv"].shape, lambda i: (0, 0, 0)),   # block index =>
            pl.BlockSpec(kp["wo"].shape, lambda i: (0, 0, 0)),     # fetched once
            pl.BlockSpec(kp["bo"].shape, lambda i: (0, 0, 0)),
            pl.BlockSpec(kp["w1ac"].shape, lambda i: (0, 0)),
            pl.BlockSpec(kp["w1og"].shape, lambda i: (0, 0)),
            pl.BlockSpec(kp["b1"].shape, lambda i: (0, 0)),
            pl.BlockSpec(kp["w2"].shape, lambda i: (0, 0)),
            pl.BlockSpec(kp["b2"].shape, lambda i: (0, 0)),
        ],
        out_specs=pl.BlockSpec((bt, 1, n), lambda i: (i, 0, 0)),
        compiler_params=pltpu.CompilerParams(
            dimension_semantics=("parallel",),            # megacore over batch blocks
            vmem_limit_bytes=32 * 1024 * 1024),           # fits every generation here
    )(enc_bf, acm, am, hog_bf, obsm, hgo_bf,
      kp["wqkv"], kp["bqkv"], kp["wo"], kp["bo"],
      kp["w1ac"], kp["w1og"], kp["b1"], kp["w2"], kp["b2"])
    return out.reshape(b, n)                              # free squeeze of the unit dim


# ----------------------------------------------------------------------------
# Pure-JAX f32 reference (same math) for validation.
# ----------------------------------------------------------------------------
def _ref_mha(x, key_mask, attn_params, num_heads):
    wq_t, wk_t, wv_t, bq, bk, bv, wo_t, bo = attn_params
    b, s, h = x.shape
    dh = h // num_heads
    q = (x @ wq_t + bq).reshape(b, s, num_heads, dh).transpose(0, 2, 1, 3)
    k = (x @ wk_t + bk).reshape(b, s, num_heads, dh).transpose(0, 2, 1, 3)
    v = (x @ wv_t + bv).reshape(b, s, num_heads, dh).transpose(0, 2, 1, 3)
    scores = jnp.einsum("bhqd,bhkd->bhqk", q, k) / math.sqrt(dh)
    scores = scores + jnp.where(key_mask == 0.0, -1e30, 0.0)[:, None, None, :]
    p = jax.nn.softmax(scores, axis=-1)
    o = jnp.einsum("bhqk,bhkd->bhqd", p, v).transpose(0, 2, 1, 3).reshape(b, s, h)
    return o @ wo_t + bo


def reference_action_scorer(enc_action_cands, action_cand_mask, action_mask,
                            h_og, h_go, obs_mask, params, num_heads):
    b, n, l, h = enc_action_cands.shape
    fx = enc_action_cands.reshape(b * n, l, h)
    fm = action_cand_mask.reshape(b * n, l)
    den = jnp.maximum(jnp.sum(fm, axis=1, keepdims=True), 1.0)
    acr = (jnp.sum(fx * fm[:, :, None], axis=1) / den).reshape(b, n, h)

    obs_attn = _ref_mha(h_og, obs_mask, params["attn_text"], num_heads)
    obs_r = (jnp.sum(obs_attn * obs_mask[:, :, None], axis=1)
             / jnp.sum(obs_mask, axis=1, keepdims=True))

    g_attn = _ref_mha(h_go, jnp.ones((b, h_go.shape[1]), jnp.float32),
                      params["attn_graph"], num_heads)
    gr_r = jnp.mean(g_attn, axis=1)

    cat = jnp.concatenate(
        [acr,
         jnp.broadcast_to(obs_r[:, None, :], (b, n, h)),
         jnp.broadcast_to(gr_r[:, None, :], (b, n, h))], axis=-1)
    hid = jnp.maximum(cat @ params["w1t"] + params["b1"], 0.0)
    hid = hid * action_mask[:, :, None]
    s = (hid @ params["w2t"])[..., 0] + params["b2"][0]
    return s * action_mask


# ----------------------------------------------------------------------------
# Deterministic parameter init (PyTorch shapes, stored pre-transposed / x@W form).
# ----------------------------------------------------------------------------
def init_params(key, hidden_dim):
    ks = jax.random.split(key, 20)

    def rnd(k, shape, scale=0.1):
        return jax.random.normal(k, shape, jnp.float32) * scale

    def attn(kk):
        return (rnd(kk[0], (hidden_dim, hidden_dim)),   # Wq^T
                rnd(kk[1], (hidden_dim, hidden_dim)),   # Wk^T
                rnd(kk[2], (hidden_dim, hidden_dim)),   # Wv^T
                rnd(kk[3], (hidden_dim,)),              # bq
                rnd(kk[4], (hidden_dim,)),              # bk
                rnd(kk[5], (hidden_dim,)),              # bv
                rnd(kk[6], (hidden_dim, hidden_dim)),   # Wo^T
                rnd(kk[7], (hidden_dim,)))              # bo

    return {
        "attn_text": attn(ks[0:8]),
        "attn_graph": attn(ks[8:16]),
        "w1t": rnd(ks[16], (3 * hidden_dim, hidden_dim)),   # Linear(3H,H) weight^T
        "b1": rnd(ks[17], (hidden_dim,)),
        "w2t": rnd(ks[18], (hidden_dim, 1)),                # Linear(H,1) weight^T
        "b2": rnd(ks[19], (1,)),
    }


if __name__ == "__main__":
    B, H, NUM_HEADS = 2, 32, 4
    N_AC, L_AC = 5, 4
    OBS_LEN, N_NODE = 8, 6

    key = jax.random.PRNGKey(0)
    ks = jax.random.split(key, 8)

    enc_action_cands = jax.random.normal(ks[0], (B, N_AC, L_AC, H), jnp.float32)
    action_cand_mask = (jax.random.uniform(ks[1], (B, N_AC, L_AC)) > 0.3).astype(jnp.float32)
    action_cand_mask = action_cand_mask.at[:, :, 0].set(1.0)   # at least one valid token
    action_mask = (jax.random.uniform(ks[2], (B, N_AC)) > 0.3).astype(jnp.float32)
    h_og = jax.random.normal(ks[3], (B, OBS_LEN, H), jnp.float32)
    h_go = jax.random.normal(ks[4], (B, N_NODE, H), jnp.float32)
    obs_mask = (jax.random.uniform(ks[5], (B, OBS_LEN)) > 0.3).astype(jnp.float32)
    obs_mask = obs_mask.at[:, 0].set(1.0)                      # at least one valid obs token

    params = init_params(ks[6], H)

    out = action_scorer_forward(enc_action_cands, action_cand_mask, action_mask,
                                h_og, h_go, obs_mask, params, NUM_HEADS)
    out = jax.block_until_ready(out)

    ref = reference_action_scorer(enc_action_cands, action_cand_mask, action_mask,
                                  h_og, h_go, obs_mask, params, NUM_HEADS)

    assert out.shape == (B, N_AC), out.shape
    # bf16 input streams + bf16 MXU operands + EUP approx reciprocal for the means
    # vs. a pure-f32 reference (softmax normalization itself is exact).
    assert jnp.allclose(out, ref, atol=4e-2, rtol=4e-2), (out, ref)
    print("KERNEL_OK")
</pallas_src>

<mosaic_0001>
module attributes {stable_mosaic.version = 11 : i64} {
  func.func @_action_scorer_kernel(%arg0: i32, %arg1: memref<1x5x4x32xbf16, #tpu.memory_space<vmem>>, %arg2: memref<1x5x4x1xf32, #tpu.memory_space<vmem>>, %arg3: memref<1x1x5xf32, #tpu.memory_space<vmem>>, %arg4: memref<1x8x32xbf16, #tpu.memory_space<vmem>>, %arg5: memref<1x1x8xf32, #tpu.memory_space<vmem>>, %arg6: memref<1x6x32xbf16, #tpu.memory_space<vmem>>, %arg7: memref<2x32x96xbf16, #tpu.memory_space<vmem>>, %arg8: memref<2x1x96xf32, #tpu.memory_space<vmem>>, %arg9: memref<2x32x32xbf16, #tpu.memory_space<vmem>>, %arg10: memref<2x1x32xf32, #tpu.memory_space<vmem>>, %arg11: memref<32x32xbf16, #tpu.memory_space<vmem>>, %arg12: memref<64x32xbf16, #tpu.memory_space<vmem>>, %arg13: memref<1x32xf32, #tpu.memory_space<vmem>>, %arg14: memref<1x32xf32, #tpu.memory_space<vmem>>, %arg15: memref<1x1xf32, #tpu.memory_space<vmem>>, %arg16: memref<1x1x5xf32, #tpu.memory_space<vmem>>) attributes {dimension_semantics = [#tpu.dimension_semantics<parallel>], iteration_bounds = array<i64: 2>, scalar_prefetch = 0 : i64, scratch_operands = 0 : i64, tpu.core_type = #tpu.core_type<tc>, window_params = [{transform_indices = @transform_0, window_bounds = array<i64: 1, 5, 4, 32>}, {transform_indices = @transform_1, window_bounds = array<i64: 1, 5, 4, 1>}, {transform_indices = @transform_2, window_bounds = array<i64: 1, 1, 5>}, {transform_indices = @transform_3, window_bounds = array<i64: 1, 8, 32>}, {transform_indices = @transform_4, window_bounds = array<i64: 1, 1, 8>}, {transform_indices = @transform_5, window_bounds = array<i64: 1, 6, 32>}, {pipeline_mode = #tpu.pipeline_mode<synchronous>, transform_indices = @transform_6, window_bounds = array<i64: 2, 32, 96>}, {pipeline_mode = #tpu.pipeline_mode<synchronous>, transform_indices = @transform_7, window_bounds = array<i64: 2, 1, 96>}, {pipeline_mode = #tpu.pipeline_mode<synchronous>, transform_indices = @transform_8, window_bounds = array<i64: 2, 32, 32>}, {pipeline_mode = #tpu.pipeline_mode<synchronous>, transform_indices = @transform_9, window_bounds = array<i64: 2, 1, 32>}, {pipeline_mode = #tpu.pipeline_mode<synchronous>, transform_indices = @transform_10, window_bounds = array<i64: 32, 32>}, {pipeline_mode = #tpu.pipeline_mode<synchronous>, transform_indices = @transform_11, window_bounds = array<i64: 64, 32>}, {pipeline_mode = #tpu.pipeline_mode<synchronous>, transform_indices = @transform_12, window_bounds = array<i64: 1, 32>}, {pipeline_mode = #tpu.pipeline_mode<synchronous>, transform_indices = @transform_13, window_bounds = array<i64: 1, 32>}, {pipeline_mode = #tpu.pipeline_mode<synchronous>, transform_indices = @transform_14, window_bounds = array<i64: 1, 1>}, {transform_indices = @transform_15, window_bounds = array<i64: 1, 1, 5>}]} {
    %c0 = arith.constant 0 : index
    %c0_0 = arith.constant 0 : index
    %c0_1 = arith.constant 0 : index
    %c0_2 = arith.constant 0 : index
    %0 = vector.load %arg1[%c0, %c0_0, %c0_1, %c0_2] : memref<1x5x4x32xbf16, #tpu.memory_space<vmem>>, vector<1x5x4x32xbf16>
    %1 = arith.extf %0 : vector<1x5x4x32xbf16> to vector<1x5x4x32xf32>
    %c0_3 = arith.constant 0 : index
    %c0_4 = arith.constant 0 : index
    %c0_5 = arith.constant 0 : index
    %c0_6 = arith.constant 0 : index
    %2 = vector.load %arg2[%c0_3, %c0_4, %c0_5, %c0_6] : memref<1x5x4x1xf32, #tpu.memory_space<vmem>>, vector<1x5x4x1xf32>
    %3 = vector.broadcast %2 : vector<1x5x4x1xf32> to vector<1x5x4x32xf32>
    %4 = arith.mulf %1, %3 : vector<1x5x4x32xf32>
    %cst = arith.constant dense<0.000000e+00> : vector<1x5x32xf32>
    %5 = vector.multi_reduction <add>, %4, %cst [2] : vector<1x5x4x32xf32> to vector<1x5x32xf32>
    %cst_7 = arith.constant dense<0.000000e+00> : vector<1x5x1xf32>
    %6 = vector.multi_reduction <add>, %2, %cst_7 [2] : vector<1x5x4x1xf32> to vector<1x5x1xf32>
    %cst_8 = arith.constant 1.000000e+00 : f32
    %7 = vector.broadcast %cst_8 : f32 to vector<1x5x1xf32>
    %8 = arith.maximumf %6, %7 : vector<1x5x1xf32>
    %9 = tpu.reciprocal %8 {approx = true} : vector<1x5x1xf32> -> vector<1x5x1xf32>
    %10 = vector.broadcast %9 : vector<1x5x1xf32> to vector<1x5x32xf32>
    %11 = arith.mulf %5, %10 : vector<1x5x32xf32>
    %c0_9 = arith.constant 0 : index
    %c0_10 = arith.constant 0 : index
    %c0_11 = arith.constant 0 : index
    %12 = vector.load %arg7[%c0_9, %c0_10, %c0_11] : memref<2x32x96xbf16, #tpu.memory_space<vmem>>, vector<1x32x96xbf16>
    %13 = vector.shape_cast %12 : vector<1x32x96xbf16> to vector<32x96xbf16>
    %c0_12 = arith.constant 0 : index
    %c0_13 = arith.constant 0 : index
    %c0_14 = arith.constant 0 : index
    %14 = vector.load %arg8[%c0_12, %c0_13, %c0_14] : memref<2x1x96xf32, #tpu.memory_space<vmem>>, vector<1x1x96xf32>
    %15 = vector.shape_cast %14 : vector<1x1x96xf32> to vector<1x96xf32>
    %c0_15 = arith.constant 0 : index
    %c0_16 = arith.constant 0 : index
    %c0_17 = arith.constant 0 : index
    %16 = vector.load %arg9[%c0_15, %c0_16, %c0_17] : memref<2x32x32xbf16, #tpu.memory_space<vmem>>, vector<1x32x32xbf16>
    %17 = vector.shape_cast %16 : vector<1x32x32xbf16> to vector<32x32xbf16>
    %c0_18 = arith.constant 0 : index
    %c0_19 = arith.constant 0 : index
    %c0_20 = arith.constant 0 : index
    %18 = vector.load %arg10[%c0_18, %c0_19, %c0_20] : memref<2x1x32xf32, #tpu.memory_space<vmem>>, vector<1x1x32xf32>
    %19 = vector.shape_cast %18 : vector<1x1x32xf32> to vector<1x32xf32>
    %c1 = arith.constant 1 : index
    %c0_21 = arith.constant 0 : index
    %c0_22 = arith.constant 0 : index
    %20 = vector.load %arg7[%c1, %c0_21, %c0_22] : memref<2x32x96xbf16, #tpu.memory_space<vmem>>, vector<1x32x96xbf16>
    %21 = vector.shape_cast %20 : vector<1x32x96xbf16> to vector<32x96xbf16>
    %c1_23 = arith.constant 1 : index
    %c0_24 = arith.constant 0 : index
    %c0_25 = arith.constant 0 : index
    %22 = vector.load %arg8[%c1_23, %c0_24, %c0_25] : memref<2x1x96xf32, #tpu.memory_space<vmem>>, vector<1x1x96xf32>
    %23 = vector.shape_cast %22 : vector<1x1x96xf32> to vector<1x96xf32>
    %c1_26 = arith.constant 1 : index
    %c0_27 = arith.constant 0 : index
    %c0_28 = arith.constant 0 : index
    %24 = vector.load %arg9[%c1_26, %c0_27, %c0_28] : memref<2x32x32xbf16, #tpu.memory_space<vmem>>, vector<1x32x32xbf16>
    %25 = vector.shape_cast %24 : vector<1x32x32xbf16> to vector<32x32xbf16>
    %c1_29 = arith.constant 1 : index
    %c0_30 = arith.constant 0 : index
    %c0_31 = arith.constant 0 : index
    %26 = vector.load %arg10[%c1_29, %c0_30, %c0_31] : memref<2x1x32xf32, #tpu.memory_space<vmem>>, vector<1x1x32xf32>
    %27 = vector.shape_cast %26 : vector<1x1x32xf32> to vector<1x32xf32>
    %c0_32 = arith.constant 0 : index
    %c0_33 = arith.constant 0 : index
    %28 = vector.load %arg12[%c0_32, %c0_33] : memref<64x32xbf16, #tpu.memory_space<vmem>>, vector<64x32xbf16>
    %c0_34 = arith.constant 0 : index
    %c0_35 = arith.constant 0 : index
    %29 = vector.load %arg11[%c0_34, %c0_35] : memref<32x32xbf16, #tpu.memory_space<vmem>>, vector<32x32xbf16>
    %c0_36 = arith.constant 0 : index
    %c0_37 = arith.constant 0 : index
    %c0_38 = arith.constant 0 : index
    %30 = vector.load %arg5[%c0_36, %c0_37, %c0_38] : memref<1x1x8xf32, #tpu.memory_space<vmem>>, vector<1x1x8xf32>
    %31 = vector.shape_cast %30 : vector<1x1x8xf32> to vector<1x8xf32>
    %cst_39 = arith.constant 1.000000e+00 : f32
    %32 = vector.broadcast %cst_39 : f32 to vector<1x8xf32>
    %33 = arith.subf %31, %32 : vector<1x8xf32>
    %cst_40 = arith.constant 1.000000e+30 : f32
    %34 = vector.broadcast %cst_40 : f32 to vector<1x8xf32>
    %35 = arith.mulf %33, %34 : vector<1x8xf32>
    %c0_41 = arith.constant 0 : index
    %c0_42 = arith.constant 0 : index
    %c0_43 = arith.constant 0 : index
    %36 = vector.load %arg4[%c0_41, %c0_42, %c0_43] : memref<1x8x32xbf16, #tpu.memory_space<vmem>>, vector<1x8x32xbf16>
    %37 = vector.shape_cast %36 : vector<1x8x32xbf16> to vector<8x32xbf16>
    %cst_44 = arith.constant dense<0.000000e+00> : vector<8x96xf32>
    %38 = tpu.matmul %37, %13, %cst_44 {dimension_numbers = #tpu.dot_dimension_numbers<[1], [0], [0], [1], [0, 0, 1, 1], [], []>} : vector<8x32xbf16>, vector<32x96xbf16>, vector<8x96xf32> -> vector<8x96xf32>
    %39 = vector.broadcast %15 : vector<1x96xf32> to vector<8x96xf32>
    %40 = arith.addf %38, %39 : vector<8x96xf32>
    %41 = vector.extract_strided_slice %40 {offsets = [0, 0], sizes = [8, 8], strides = [1, 1]} : vector<8x96xf32> to vector<8x8xf32>
    %42 = arith.truncf %41 : vector<8x8xf32> to vector<8x8xbf16>
    %43 = vector.extract_strided_slice %40 {offsets = [0, 32], sizes = [8, 8], strides = [1, 1]} : vector<8x96xf32> to vector<8x8xf32>
    %44 = arith.truncf %43 : vector<8x8xf32> to vector<8x8xbf16>
    %45 = vector.extract_strided_slice %40 {offsets = [0, 64], sizes = [8, 8], strides = [1, 1]} : vector<8x96xf32> to vector<8x8xf32>
    %46 = arith.truncf %45 : vector<8x8xf32> to vector<8x8xbf16>
    %47 = tpu.transpose %44, [1, 0] : vector<8x8xbf16> -> vector<8x8xbf16>
    %cst_45 = arith.constant dense<0.000000e+00> : vector<8x8xf32>
    %48 = tpu.matmul %42, %47, %cst_45 {dimension_numbers = #tpu.dot_dimension_numbers<[1], [0], [0], [1], [0, 0, 1, 1], [], []>} : vector<8x8xbf16>, vector<8x8xbf16>, vector<8x8xf32> -> vector<8x8xf32>
    %49 = vector.broadcast %35 : vector<1x8xf32> to vector<8x8xf32>
    %50 = arith.addf %48, %49 : vector<8x8xf32>
    %cst_46 = arith.constant dense<0xFF800000> : vector<8xf32>
    %51 = vector.multi_reduction <maximumf>, %50, %cst_46 [1] : vector<8x8xf32> to vector<8xf32>
    %52 = vector.shape_cast %51 : vector<8xf32> to vector<8x1xf32>
    %53 = vector.broadcast %52 : vector<8x1xf32> to vector<8x8xf32>
    %54 = arith.subf %50, %53 : vector<8x8xf32>
    %55 = math.exp %54 : vector<8x8xf32>
    %cst_47 = arith.constant dense<0.000000e+00> : vector<8xf32>
    %56 = vector.multi_reduction <add>, %55, %cst_47 [1] : vector<8x8xf32> to vector<8xf32>
    %57 = vector.shape_cast %56 : vector<8xf32> to vector<8x1xf32>
    %58 = vector.broadcast %57 : vector<8x1xf32> to vector<8x8xf32>
    %59 = arith.divf %55, %58 : vector<8x8xf32>
    %60 = arith.truncf %59 : vector<8x8xf32> to vector<8x8xbf16>
    %cst_48 = arith.constant dense<0.000000e+00> : vector<8x8xf32>
    %61 = tpu.matmul %60, %46, %cst_48 {dimension_numbers = #tpu.dot_dimension_numbers<[1], [0], [0], [1], [0, 0, 1, 1], [], []>} : vector<8x8xbf16>, vector<8x8xbf16>, vector<8x8xf32> -> vector<8x8xf32>
    %62 = vector.extract_strided_slice %40 {offsets = [0, 8], sizes = [8, 8], strides = [1, 1]} : vector<8x96xf32> to vector<8x8xf32>
    %63 = arith.truncf %62 : vector<8x8xf32> to vector<8x8xbf16>
    %64 = vector.extract_strided_slice %40 {offsets = [0, 40], sizes = [8, 8], strides = [1, 1]} : vector<8x96xf32> to vector<8x8xf32>
    %65 = arith.truncf %64 : vector<8x8xf32> to vector<8x8xbf16>
    %66 = vector.extract_strided_slice %40 {offsets = [0, 72], sizes = [8, 8], strides = [1, 1]} : vector<8x96xf32> to vector<8x8xf32>
    %67 = arith.truncf %66 : vector<8x8xf32> to vector<8x8xbf16>
    %68 = tpu.transpose %65, [1, 0] : vector<8x8xbf16> -> vector<8x8xbf16>
    %cst_49 = arith.constant dense<0.000000e+00> : vector<8x8xf32>
    %69 = tpu.matmul %63, %68, %cst_49 {dimension_numbers = #tpu.dot_dimension_numbers<[1], [0], [0], [1], [0, 0, 1, 1], [], []>} : vector<8x8xbf16>, vector<8x8xbf16>, vector<8x8xf32> -> vector<8x8xf32>
    %70 = vector.broadcast %35 : vector<1x8xf32> to vector<8x8xf32>
    %71 = arith.addf %69, %70 : vector<8x8xf32>
    %cst_50 = arith.constant dense<0xFF800000> : vector<8xf32>
    %72 = vector.multi_reduction <maximumf>, %71, %cst_50 [1] : vector<8x8xf32> to vector<8xf32>
    %73 = vector.shape_cast %72 : vector<8xf32> to vector<8x1xf32>
    %74 = vector.broadcast %73 : vector<8x1xf32> to vector<8x8xf32>
    %75 = arith.subf %71, %74 : vector<8x8xf32>
    %76 = math.exp %75 : vector<8x8xf32>
    %cst_51 = arith.constant dense<0.000000e+00> : vector<8xf32>
    %77 = vector.multi_reduction <add>, %76, %cst_51 [1] : vector<8x8xf32> to vector<8xf32>
    %78 = vector.shape_cast %77 : vector<8xf32> to vector<8x1xf32>
    %79 = vector.broadcast %78 : vector<8x1xf32> to vector<8x8xf32>
    %80 = arith.divf %76, %79 : vector<8x8xf32>
    %81 = arith.truncf %80 : vector<8x8xf32> to vector<8x8xbf16>
    %cst_52 = arith.constant dense<0.000000e+00> : vector<8x8xf32>
    %82 = tpu.matmul %81, %67, %cst_52 {dimension_numbers = #tpu.dot_dimension_numbers<[1], [0], [0], [1], [0, 0, 1, 1], [], []>} : vector<8x8xbf16>, vector<8x8xbf16>, vector<8x8xf32> -> vector<8x8xf32>
    %83 = vector.extract_strided_slice %40 {offsets = [0, 16], sizes = [8, 8], strides = [1, 1]} : vector<8x96xf32> to vector<8x8xf32>
    %84 = arith.truncf %83 : vector<8x8xf32> to vector<8x8xbf16>
    %85 = vector.extract_strided_slice %40 {offsets = [0, 48], sizes = [8, 8], strides = [1, 1]} : vector<8x96xf32> to vector<8x8xf32>
    %86 = arith.truncf %85 : vector<8x8xf32> to vector<8x8xbf16>
    %87 = vector.extract_strided_slice %40 {offsets = [0, 80], sizes = [8, 8], strides = [1, 1]} : vector<8x96xf32> to vector<8x8xf32>
    %88 = arith.truncf %87 : vector<8x8xf32> to vector<8x8xbf16>
    %89 = tpu.transpose %86, [1, 0] : vector<8x8xbf16> -> vector<8x8xbf16>
    %cst_53 = arith.constant dense<0.000000e+00> : vector<8x8xf32>
    %90 = tpu.matmul %84, %89, %cst_53 {dimension_numbers = #tpu.dot_dimension_numbers<[1], [0], [0], [1], [0, 0, 1, 1], [], []>} : vector<8x8xbf16>, vector<8x8xbf16>, vector<8x8xf32> -> vector<8x8xf32>
    %91 = vector.broadcast %35 : vector<1x8xf32> to vector<8x8xf32>
    %92 = arith.addf %90, %91 : vector<8x8xf32>
    %cst_54 = arith.constant dense<0xFF800000> : vector<8xf32>
    %93 = vector.multi_reduction <maximumf>, %92, %cst_54 [1] : vector<8x8xf32> to vector<8xf32>
    %94 = vector.shape_cast %93 : vector<8xf32> to vector<8x1xf32>
    %95 = vector.broadcast %94 : vector<8x1xf32> to vector<8x8xf32>
    %96 = arith.subf %92, %95 : vector<8x8xf32>
    %97 = math.exp %96 : vector<8x8xf32>
    %cst_55 = arith.constant dense<0.000000e+00> : vector<8xf32>
    %98 = vector.multi_reduction <add>, %97, %cst_55 [1] : vector<8x8xf32> to vector<8xf32>
    %99 = vector.shape_cast %98 : vector<8xf32> to vector<8x1xf32>
    %100 = vector.broadcast %99 : vector<8x1xf32> to vector<8x8xf32>
    %101 = arith.divf %97, %100 : vector<8x8xf32>
    %102 = arith.truncf %101 : vector<8x8xf32> to vector<8x8xbf16>
    %cst_56 = arith.constant dense<0.000000e+00> : vector<8x8xf32>
    %103 = tpu.matmul %102, %88, %cst_56 {dimension_numbers = #tpu.dot_dimension_numbers<[1], [0], [0], [1], [0, 0, 1, 1], [], []>} : vector<8x8xbf16>, vector<8x8xbf16>, vector<8x8xf32> -> vector<8x8xf32>
    %104 = vector.extract_strided_slice %40 {offsets = [0, 24], sizes = [8, 8], strides = [1, 1]} : vector<8x96xf32> to vector<8x8xf32>
    %105 = arith.truncf %104 : vector<8x8xf32> to vector<8x8xbf16>
    %106 = vector.extract_strided_slice %40 {offsets = [0, 56], sizes = [8, 8], strides = [1, 1]} : vector<8x96xf32> to vector<8x8xf32>
    %107 = arith.truncf %106 : vector<8x8xf32> to vector<8x8xbf16>
    %108 = vector.extract_strided_slice %40 {offsets = [0, 88], sizes = [8, 8], strides = [1, 1]} : vector<8x96xf32> to vector<8x8xf32>
    %109 = arith.truncf %108 : vector<8x8xf32> to vector<8x8xbf16>
    %110 = tpu.transpose %107, [1, 0] : vector<8x8xbf16> -> vector<8x8xbf16>
    %cst_57 = arith.constant dense<0.000000e+00> : vector<8x8xf32>
    %111 = tpu.matmul %105, %110, %cst_57 {dimension_numbers = #tpu.dot_dimension_numbers<[1], [0], [0], [1], [0, 0, 1, 1], [], []>} : vector<8x8xbf16>, vector<8x8xbf16>, vector<8x8xf32> -> vector<8x8xf32>
    %112 = vector.broadcast %35 : vector<1x8xf32> to vector<8x8xf32>
    %113 = arith.addf %111, %112 : vector<8x8xf32>
    %cst_58 = arith.constant dense<0xFF800000> : vector<8xf32>
    %114 = vector.multi_reduction <maximumf>, %113, %cst_58 [1] : vector<8x8xf32> to vector<8xf32>
    %115 = vector.shape_cast %114 : vector<8xf32> to vector<8x1xf32>
    %116 = vector.broadcast %115 : vector<8x1xf32> to vector<8x8xf32>
    %117 = arith.subf %113, %116 : vector<8x8xf32>
    %118 = math.exp %117 : vector<8x8xf32>
    %cst_59 = arith.constant dense<0.000000e+00> : vector<8xf32>
    %119 = vector.multi_reduction <add>, %118, %cst_59 [1] : vector<8x8xf32> to vector<8xf32>
    %120 = vector.shape_cast %119 : vector<8xf32> to vector<8x1xf32>
    %121 = vector.broadcast %120 : vector<8x1xf32> to vector<8x8xf32>
    %122 = arith.divf %118, %121 : vector<8x8xf32>
    %123 = arith.truncf %122 : vector<8x8xf32> to vector<8x8xbf16>
    %cst_60 = arith.constant dense<0.000000e+00> : vector<8x8xf32>
    %124 = tpu.matmul %123, %109, %cst_60 {dimension_numbers = #tpu.dot_dimension_numbers<[1], [0], [0], [1], [0, 0, 1, 1], [], []>} : vector<8x8xbf16>, vector<8x8xbf16>, vector<8x8xf32> -> vector<8x8xf32>
    %125 = tpu.concatenate %61, %82, %103, %124 in 1 : vector<8x8xf32>, vector<8x8xf32>, vector<8x8xf32>, vector<8x8xf32> -> vector<8x32xf32>
    %126 = arith.truncf %125 : vector<8x32xf32> to vector<8x32xbf16>
    %cst_61 = arith.constant dense<0.000000e+00> : vector<8x32xf32>
    %127 = tpu.matmul %126, %17, %cst_61 {dimension_numbers = #tpu.dot_dimension_numbers<[1], [0], [0], [1], [0, 0, 1, 1], [], []>} : vector<8x32xbf16>, vector<32x32xbf16>, vector<8x32xf32> -> vector<8x32xf32>
    %128 = vector.broadcast %19 : vector<1x32xf32> to vector<8x32xf32>
    %129 = arith.addf %127, %128 : vector<8x32xf32>
    %cst_62 = arith.constant dense<0.000000e+00> : vector<1x32xf32>
    %130 = tpu.matmul %31, %129, %cst_62 {dimension_numbers = #tpu.dot_dimension_numbers<[1], [0], [0], [1], [0, 0, 1, 1], [], []>} : vector<1x8xf32>, vector<8x32xf32>, vector<1x32xf32> -> vector<1x32xf32>
    %cst_63 = arith.constant dense<0.000000e+00> : vector<1xf32>
    %131 = vector.multi_reduction <add>, %31, %cst_63 [1] : vector<1x8xf32> to vector<1xf32>
    %132 = vector.shape_cast %131 : vector<1xf32> to vector<1x1xf32>
    %133 = tpu.reciprocal %132 {approx = true} : vector<1x1xf32> -> vector<1x1xf32>
    %134 = vector.broadcast %133 : vector<1x1xf32> to vector<1x32xf32>
    %135 = arith.mulf %130, %134 : vector<1x32xf32>
    %c0_64 = arith.constant 0 : index
    %c0_65 = arith.constant 0 : index
    %c0_66 = arith.constant 0 : index
    %136 = vector.load %arg6[%c0_64, %c0_65, %c0_66] : memref<1x6x32xbf16, #tpu.memory_space<vmem>>, vector<1x6x32xbf16>
    %137 = vector.shape_cast %136 : vector<1x6x32xbf16> to vector<6x32xbf16>
    %cst_67 = arith.constant dense<0.000000e+00> : vector<6x96xf32>
    %138 = tpu.matmul %137, %21, %cst_67 {dimension_numbers = #tpu.dot_dimension_numbers<[1], [0], [0], [1], [0, 0, 1, 1], [], []>} : vector<6x32xbf16>, vector<32x96xbf16>, vector<6x96xf32> -> vector<6x96xf32>
    %139 = vector.broadcast %23 : vector<1x96xf32> to vector<6x96xf32>
    %140 = arith.addf %138, %139 : vector<6x96xf32>
    %141 = vector.extract_strided_slice %140 {offsets = [0, 0], sizes = [6, 8], strides = [1, 1]} : vector<6x96xf32> to vector<6x8xf32>
    %142 = arith.truncf %141 : vector<6x8xf32> to vector<6x8xbf16>
    %143 = vector.extract_strided_slice %140 {offsets = [0, 32], sizes = [6, 8], strides = [1, 1]} : vector<6x96xf32> to vector<6x8xf32>
    %144 = arith.truncf %143 : vector<6x8xf32> to vector<6x8xbf16>
    %145 = vector.extract_strided_slice %140 {offsets = [0, 64], sizes = [6, 8], strides = [1, 1]} : vector<6x96xf32> to vector<6x8xf32>
    %146 = arith.truncf %145 : vector<6x8xf32> to vector<6x8xbf16>
    %147 = tpu.transpose %144, [1, 0] : vector<6x8xbf16> -> vector<8x6xbf16>
    %cst_68 = arith.constant dense<0.000000e+00> : vector<6x6xf32>
    %148 = tpu.matmul %142, %147, %cst_68 {dimension_numbers = #tpu.dot_dimension_numbers<[1], [0], [0], [1], [0, 0, 1, 1], [], []>} : vector<6x8xbf16>, vector<8x6xbf16>, vector<6x6xf32> -> vector<6x6xf32>
    %cst_69 = arith.constant dense<0xFF800000> : vector<6xf32>
    %149 = vector.multi_reduction <maximumf>, %148, %cst_69 [1] : vector<6x6xf32> to vector<6xf32>
    %150 = vector.shape_cast %149 : vector<6xf32> to vector<6x1xf32>
    %151 = vector.broadcast %150 : vector<6x1xf32> to vector<6x6xf32>
    %152 = arith.subf %148, %151 : vector<6x6xf32>
    %153 = math.exp %152 : vector<6x6xf32>
    %cst_70 = arith.constant dense<0.000000e+00> : vector<6xf32>
    %154 = vector.multi_reduction <add>, %153, %cst_70 [1] : vector<6x6xf32> to vector<6xf32>
    %155 = vector.shape_cast %154 : vector<6xf32> to vector<6x1xf32>
    %156 = vector.broadcast %155 : vector<6x1xf32> to vector<6x6xf32>
    %157 = arith.divf %153, %156 : vector<6x6xf32>
    %158 = arith.truncf %157 : vector<6x6xf32> to vector<6x6xbf16>
    %cst_71 = arith.constant dense<0.000000e+00> : vector<6x8xf32>
    %159 = tpu.matmul %158, %146, %cst_71 {dimension_numbers = #tpu.dot_dimension_numbers<[1], [0], [0], [1], [0, 0, 1, 1], [], []>} : vector<6x6xbf16>, vector<6x8xbf16>, vector<6x8xf32> -> vector<6x8xf32>
    %160 = vector.extract_strided_slice %140 {offsets = [0, 8], sizes = [6, 8], strides = [1, 1]} : vector<6x96xf32> to vector<6x8xf32>
    %161 = arith.truncf %160 : vector<6x8xf32> to vector<6x8xbf16>
    %162 = vector.extract_strided_slice %140 {offsets = [0, 40], sizes = [6, 8], strides = [1, 1]} : vector<6x96xf32> to vector<6x8xf32>
    %163 = arith.truncf %162 : vector<6x8xf32> to vector<6x8xbf16>
    %164 = vector.extract_strided_slice %140 {offsets = [0, 72], sizes = [6, 8], strides = [1, 1]} : vector<6x96xf32> to vector<6x8xf32>
    %165 = arith.truncf %164 : vector<6x8xf32> to vector<6x8xbf16>
    %166 = tpu.transpose %163, [1, 0] : vector<6x8xbf16> -> vector<8x6xbf16>
    %cst_72 = arith.constant dense<0.000000e+00> : vector<6x6xf32>
    %167 = tpu.matmul %161, %166, %cst_72 {dimension_numbers = #tpu.dot_dimension_numbers<[1], [0], [0], [1], [0, 0, 1, 1], [], []>} : vector<6x8xbf16>, vector<8x6xbf16>, vector<6x6xf32> -> vector<6x6xf32>
    %cst_73 = arith.constant dense<0xFF800000> : vector<6xf32>
    %168 = vector.multi_reduction <maximumf>, %167, %cst_73 [1] : vector<6x6xf32> to vector<6xf32>
    %169 = vector.shape_cast %168 : vector<6xf32> to vector<6x1xf32>
    %170 = vector.broadcast %169 : vector<6x1xf32> to vector<6x6xf32>
    %171 = arith.subf %167, %170 : vector<6x6xf32>
    %172 = math.exp %171 : vector<6x6xf32>
    %cst_74 = arith.constant dense<0.000000e+00> : vector<6xf32>
    %173 = vector.multi_reduction <add>, %172, %cst_74 [1] : vector<6x6xf32> to vector<6xf32>
    %174 = vector.shape_cast %173 : vector<6xf32> to vector<6x1xf32>
    %175 = vector.broadcast %174 : vector<6x1xf32> to vector<6x6xf32>
    %176 = arith.divf %172, %175 : vector<6x6xf32>
    %177 = arith.truncf %176 : vector<6x6xf32> to vector<6x6xbf16>
    %cst_75 = arith.constant dense<0.000000e+00> : vector<6x8xf32>
    %178 = tpu.matmul %177, %165, %cst_75 {dimension_numbers = #tpu.dot_dimension_numbers<[1], [0], [0], [1], [0, 0, 1, 1], [], []>} : vector<6x6xbf16>, vector<6x8xbf16>, vector<6x8xf32> -> vector<6x8xf32>
    %179 = vector.extract_strided_slice %140 {offsets = [0, 16], sizes = [6, 8], strides = [1, 1]} : vector<6x96xf32> to vector<6x8xf32>
    %180 = arith.truncf %179 : vector<6x8xf32> to vector<6x8xbf16>
    %181 = vector.extract_strided_slice %140 {offsets = [0, 48], sizes = [6, 8], strides = [1, 1]} : vector<6x96xf32> to vector<6x8xf32>
    %182 = arith.truncf %181 : vector<6x8xf32> to vector<6x8xbf16>
    %183 = vector.extract_strided_slice %140 {offsets = [0, 80], sizes = [6, 8], strides = [1, 1]} : vector<6x96xf32> to vector<6x8xf32>
    %184 = arith.truncf %183 : vector<6x8xf32> to vector<6x8xbf16>
    %185 = tpu.transpose %182, [1, 0] : vector<6x8xbf16> -> vector<8x6xbf16>
    %cst_76 = arith.constant dense<0.000000e+00> : vector<6x6xf32>
    %186 = tpu.matmul %180, %185, %cst_76 {dimension_numbers = #tpu.dot_dimension_numbers<[1], [0], [0], [1], [0, 0, 1, 1], [], []>} : vector<6x8xbf16>, vector<8x6xbf16>, vector<6x6xf32> -> vector<6x6xf32>
    %cst_77 = arith.constant dense<0xFF800000> : vector<6xf32>
    %187 = vector.multi_reduction <maximumf>, %186, %cst_77 [1] : vector<6x6xf32> to vector<6xf32>
    %188 = vector.shape_cast %187 : vector<6xf32> to vector<6x1xf32>
    %189 = vector.broadcast %188 : vector<6x1xf32> to vector<6x6xf32>
    %190 = arith.subf %186, %189 : vector<6x6xf32>
    %191 = math.exp %190 : vector<6x6xf32>
    %cst_78 = arith.constant dense<0.000000e+00> : vector<6xf32>
    %192 = vector.multi_reduction <add>, %191, %cst_78 [1] : vector<6x6xf32> to vector<6xf32>
    %193 = vector.shape_cast %192 : vector<6xf32> to vector<6x1xf32>
    %194 = vector.broadcast %193 : vector<6x1xf32> to vector<6x6xf32>
    %195 = arith.divf %191, %194 : vector<6x6xf32>
    %196 = arith.truncf %195 : vector<6x6xf32> to vector<6x6xbf16>
    %cst_79 = arith.constant dense<0.000000e+00> : vector<6x8xf32>
    %197 = tpu.matmul %196, %184, %cst_79 {dimension_numbers = #tpu.dot_dimension_numbers<[1], [0], [0], [1], [0, 0, 1, 1], [], []>} : vector<6x6xbf16>, vector<6x8xbf16>, vector<6x8xf32> -> vector<6x8xf32>
    %198 = vector.extract_strided_slice %140 {offsets = [0, 24], sizes = [6, 8], strides = [1, 1]} : vector<6x96xf32> to vector<6x8xf32>
    %199 = arith.truncf %198 : vector<6x8xf32> to vector<6x8xbf16>
    %200 = vector.extract_strided_slice %140 {offsets = [0, 56], sizes = [6, 8], strides = [1, 1]} : vector<6x96xf32> to vector<6x8xf32>
    %201 = arith.truncf %200 : vector<6x8xf32> to vector<6x8xbf16>
    %202 = vector.extract_strided_slice %140 {offsets = [0, 88], sizes = [6, 8], strides = [1, 1]} : vector<6x96xf32> to vector<6x8xf32>
    %203 = arith.truncf %202 : vector<6x8xf32> to vector<6x8xbf16>
    %204 = tpu.transpose %201, [1, 0] : vector<6x8xbf16> -> vector<8x6xbf16>
    %cst_80 = arith.constant dense<0.000000e+00> : vector<6x6xf32>
    %205 = tpu.matmul %199, %204, %cst_80 {dimension_numbers = #tpu.dot_dimension_numbers<[1], [0], [0], [1], [0, 0, 1, 1], [], []>} : vector<6x8xbf16>, vector<8x6xbf16>, vector<6x6xf32> -> vector<6x6xf32>
    %cst_81 = arith.constant dense<0xFF800000> : vector<6xf32>
    %206 = vector.multi_reduction <maximumf>, %205, %cst_81 [1] : vector<6x6xf32> to vector<6xf32>
    %207 = vector.shape_cast %206 : vector<6xf32> to vector<6x1xf32>
    %208 = vector.broadcast %207 : vector<6x1xf32> to vector<6x6xf32>
    %209 = arith.subf %205, %208 : vector<6x6xf32>
    %210 = math.exp %209 : vector<6x6xf32>
    %cst_82 = arith.constant dense<0.000000e+00> : vector<6xf32>
    %211 = vector.multi_reduction <add>, %210, %cst_82 [1] : vector<6x6xf32> to vector<6xf32>
    %212 = vector.shape_cast %211 : vector<6xf32> to vector<6x1xf32>
    %213 = vector.broadcast %212 : vector<6x1xf32> to vector<6x6xf32>
    %214 = arith.divf %210, %213 : vector<6x6xf32>
    %215 = arith.truncf %214 : vector<6x6xf32> to vector<6x6xbf16>
    %cst_83 = arith.constant dense<0.000000e+00> : vector<6x8xf32>
    %216 = tpu.matmul %215, %203, %cst_83 {dimension_numbers = #tpu.dot_dimension_numbers<[1], [0], [0], [1], [0, 0, 1, 1], [], []>} : vector<6x6xbf16>, vector<6x8xbf16>, vector<6x8xf32> -> vector<6x8xf32>
    %217 = tpu.concatenate %159, %178, %197, %216 in 1 : vector<6x8xf32>, vector<6x8xf32>, vector<6x8xf32>, vector<6x8xf32> -> vector<6x32xf32>
    %218 = arith.truncf %217 : vector<6x32xf32> to vector<6x32xbf16>
    %cst_84 = arith.constant dense<0.000000e+00> : vector<6x32xf32>
    %219 = tpu.matmul %218, %25, %cst_84 {dimension_numbers = #tpu.dot_dimension_numbers<[1], [0], [0], [1], [0, 0, 1, 1], [], []>} : vector<6x32xbf16>, vector<32x32xbf16>, vector<6x32xf32> -> vector<6x32xf32>
    %220 = vector.broadcast %27 : vector<1x32xf32> to vector<6x32xf32>
    %221 = arith.addf %219, %220 : vector<6x32xf32>
    %cst_85 = arith.constant dense<0.000000e+00> : vector<32xf32>
    %222 = vector.multi_reduction <add>, %221, %cst_85 [0] : vector<6x32xf32> to vector<32xf32>
    %223 = vector.shape_cast %222 : vector<32xf32> to vector<1x32xf32>
    %cst_86 = arith.constant 6.000000e+00 : f32
    %224 = vector.broadcast %cst_86 : f32 to vector<1x32xf32>
    %225 = arith.divf %223, %224 : vector<1x32xf32>
    %226 = tpu.concatenate %135, %225 in 1 : vector<1x32xf32>, vector<1x32xf32> -> vector<1x64xf32>
    %227 = arith.truncf %226 : vector<1x64xf32> to vector<1x64xbf16>
    %cst_87 = arith.constant dense<0.000000e+00> : vector<1x32xf32>
    %228 = tpu.matmul %227, %28, %cst_87 {dimension_numbers = #tpu.dot_dimension_numbers<[1], [0], [0], [1], [0, 0, 1, 1], [], []>} : vector<1x64xbf16>, vector<64x32xbf16>, vector<1x32xf32> -> vector<1x32xf32>
    %229 = vector.shape_cast %11 : vector<1x5x32xf32> to vector<5x32xf32>
    %230 = arith.truncf %229 : vector<5x32xf32> to vector<5x32xbf16>
    %cst_88 = arith.constant dense<0.000000e+00> : vector<5x32xf32>
    %231 = tpu.matmul %230, %29, %cst_88 {dimension_numbers = #tpu.dot_dimension_numbers<[1], [0], [0], [1], [0, 0, 1, 1], [], []>} : vector<5x32xbf16>, vector<32x32xbf16>, vector<5x32xf32> -> vector<5x32xf32>
    %232 = vector.shape_cast %231 : vector<5x32xf32> to vector<1x5x32xf32>
    %233 = vector.shape_cast %228 : vector<1x32xf32> to vector<1x1x32xf32>
    %234 = vector.broadcast %233 : vector<1x1x32xf32> to vector<1x5x32xf32>
    %235 = arith.addf %232, %234 : vector<1x5x32xf32>
    %c0_89 = arith.constant 0 : index
    %c0_90 = arith.constant 0 : index
    %236 = vector.load %arg13[%c0_89, %c0_90] : memref<1x32xf32, #tpu.memory_space<vmem>>, vector<1x32xf32>
    %237 = vector.shape_cast %236 : vector<1x32xf32> to vector<1x1x32xf32>
    %238 = vector.broadcast %237 : vector<1x1x32xf32> to vector<1x5x32xf32>
    %239 = arith.addf %235, %238 : vector<1x5x32xf32>
    %cst_91 = arith.constant 0.000000e+00 : f32
    %240 = vector.broadcast %cst_91 : f32 to vector<1x5x32xf32>
    %241 = arith.maximumf %239, %240 : vector<1x5x32xf32>
    %c0_92 = arith.constant 0 : index
    %c0_93 = arith.constant 0 : index
    %242 = vector.load %arg14[%c0_92, %c0_93] : memref<1x32xf32, #tpu.memory_space<vmem>>, vector<1x32xf32>
    %243 = vector.shape_cast %242 : vector<1x32xf32> to vector<1x1x32xf32>
    %244 = vector.broadcast %243 : vector<1x1x32xf32> to vector<1x5x32xf32>
    %245 = arith.mulf %241, %244 : vector<1x5x32xf32>
    %cst_94 = arith.constant dense<0.000000e+00> : vector<1x5xf32>
    %246 = vector.multi_reduction <add>, %245, %cst_94 [2] : vector<1x5x32xf32> to vector<1x5xf32>
    %c0_95 = arith.constant 0 : index
    %c0_96 = arith.constant 0 : index
    %c0_97 = arith.constant 0 : index
    %247 = vector.load %arg3[%c0_95, %c0_96, %c0_97] : memref<1x1x5xf32, #tpu.memory_space<vmem>>, vector<1x1x5xf32>
    %248 = vector.shape_cast %247 : vector<1x1x5xf32> to vector<1x5xf32>
    %249 = arith.mulf %248, %246 : vector<1x5xf32>
    %c0_98 = arith.constant 0 : index
    %c0_99 = arith.constant 0 : index
    %250 = vector.load %arg15[%c0_98, %c0_99] : memref<1x1xf32, #tpu.memory_space<vmem>>, vector<1x1xf32>
    %251 = vector.broadcast %250 : vector<1x1xf32> to vector<1x5xf32>
    %252 = arith.addf %249, %251 : vector<1x5xf32>
    %253 = arith.mulf %252, %248 : vector<1x5xf32>
    %c0_100 = arith.constant 0 : index
    %c0_101 = arith.constant 0 : index
    %c0_102 = arith.constant 0 : index
    %254 = vector.load %arg16[%c0_100, %c0_101, %c0_102] : memref<1x1x5xf32, #tpu.memory_space<vmem>>, vector<1x1x5xf32>
    %255 = vector.shape_cast %254 : vector<1x1x5xf32> to vector<1x5xf32>
    %256 = vector.shape_cast %253 : vector<1x5xf32> to vector<1x1x5xf32>
    tpu.vector_store %arg16[%c0_100, %c0_101, %c0_102], %256 {strides = array<i32>} : memref<1x1x5xf32, #tpu.memory_space<vmem>>, vector<1x1x5xf32>,
    return
  }
  func.func @transform_0(%arg0: i32) -> (i32, i32, i32, i32) {
    %c0_i32 = arith.constant 0 : i32
    %c0_i32_0 = arith.constant 0 : i32
    %c0_i32_1 = arith.constant 0 : i32
    %c0_i32_2 = arith.constant 0 : i32
    return %arg0, %c0_i32, %c0_i32_0, %c0_i32_1 : i32, i32, i32, i32
  }
  func.func @transform_1(%arg0: i32) -> (i32, i32, i32, i32) {
    %c0_i32 = arith.constant 0 : i32
    %c0_i32_0 = arith.constant 0 : i32
    %c0_i32_1 = arith.constant 0 : i32
    %c0_i32_2 = arith.constant 0 : i32
    return %arg0, %c0_i32, %c0_i32_0, %c0_i32_1 : i32, i32, i32, i32
  }
  func.func @transform_2(%arg0: i32) -> (i32, i32, i32) {
    %c0_i32 = arith.constant 0 : i32
    %c0_i32_0 = arith.constant 0 : i32
    %c0_i32_1 = arith.constant 0 : i32
    return %arg0, %c0_i32, %c0_i32_0 : i32, i32, i32
  }
  func.func @transform_3(%arg0: i32) -> (i32, i32, i32) {
    %c0_i32 = arith.constant 0 : i32
    %c0_i32_0 = arith.constant 0 : i32
    %c0_i32_1 = arith.constant 0 : i32
    return %arg0, %c0_i32, %c0_i32_0 : i32, i32, i32
  }
  func.func @transform_4(%arg0: i32) -> (i32, i32, i32) {
    %c0_i32 = arith.constant 0 : i32
    %c0_i32_0 = arith.constant 0 : i32
    %c0_i32_1 = arith.constant 0 : i32
    return %arg0, %c0_i32, %c0_i32_0 : i32, i32, i32
  }
  func.func @transform_5(%arg0: i32) -> (i32, i32, i32) {
    %c0_i32 = arith.constant 0 : i32
    %c0_i32_0 = arith.constant 0 : i32
    %c0_i32_1 = arith.constant 0 : i32
    return %arg0, %c0_i32, %c0_i32_0 : i32, i32, i32
  }
  func.func @transform_6(%arg0: i32) -> (i32, i32, i32) {
    %c0_i32 = arith.constant 0 : i32
    %c0_i32_0 = arith.constant 0 : i32
    %c0_i32_1 = arith.constant 0 : i32
    %c0_i32_2 = arith.constant 0 : i32
    return %c0_i32, %c0_i32_0, %c0_i32_1 : i32, i32, i32
  }
  func.func @transform_7(%arg0: i32) -> (i32, i32, i32) {
    %c0_i32 = arith.constant 0 : i32
    %c0_i32_0 = arith.constant 0 : i32
    %c0_i32_1 = arith.constant 0 : i32
    %c0_i32_2 = arith.constant 0 : i32
    return %c0_i32, %c0_i32_0, %c0_i32_1 : i32, i32, i32
  }
  func.func @transform_8(%arg0: i32) -> (i32, i32, i32) {
    %c0_i32 = arith.constant 0 : i32
    %c0_i32_0 = arith.constant 0 : i32
    %c0_i32_1 = arith.constant 0 : i32
    %c0_i32_2 = arith.constant 0 : i32
    return %c0_i32, %c0_i32_0, %c0_i32_1 : i32, i32, i32
  }
  func.func @transform_9(%arg0: i32) -> (i32, i32, i32) {
    %c0_i32 = arith.constant 0 : i32
    %c0_i32_0 = arith.constant 0 : i32
    %c0_i32_1 = arith.constant 0 : i32
    %c0_i32_2 = arith.constant 0 : i32
    return %c0_i32, %c0_i32_0, %c0_i32_1 : i32, i32, i32
  }
  func.func @transform_10(%arg0: i32) -> (i32, i32) {
    %c0_i32 = arith.constant 0 : i32
    %c0_i32_0 = arith.constant 0 : i32
    %c0_i32_1 = arith.constant 0 : i32
    return %c0_i32, %c0_i32_0 : i32, i32
  }
  func.func @transform_11(%arg0: i32) -> (i32, i32) {
    %c0_i32 = arith.constant 0 : i32
    %c0_i32_0 = arith.constant 0 : i32
    %c0_i32_1 = arith.constant 0 : i32
    return %c0_i32, %c0_i32_0 : i32, i32
  }
  func.func @transform_12(%arg0: i32) -> (i32, i32) {
    %c0_i32 = arith.constant 0 : i32
    %c0_i32_0 = arith.constant 0 : i32
    %c0_i32_1 = arith.constant 0 : i32
    return %c0_i32, %c0_i32_0 : i32, i32
  }
  func.func @transform_13(%arg0: i32) -> (i32, i32) {
    %c0_i32 = arith.constant 0 : i32
    %c0_i32_0 = arith.constant 0 : i32
    %c0_i32_1 = arith.constant 0 : i32
    return %c0_i32, %c0_i32_0 : i32, i32
  }
  func.func @transform_14(%arg0: i32) -> (i32, i32) {
    %c0_i32 = arith.constant 0 : i32
    %c0_i32_0 = arith.constant 0 : i32
    %c0_i32_1 = arith.constant 0 : i32
    return %c0_i32, %c0_i32_0 : i32, i32
  }
  func.func @transform_15(%arg0: i32) -> (i32, i32, i32) {
    %c0_i32 = arith.constant 0 : i32
    %c0_i32_0 = arith.constant 0 : i32
    %c0_i32_1 = arith.constant 0 : i32
    return %arg0, %c0_i32, %c0_i32_0 : i32, i32, i32
  }
}

</mosaic_0001>

<llo_original>
// kernel: tpu_custom_call.1
$region0: #{tpu_custom_call.1}
  #allocation0 [shape = 'u32[]', space=smem, size = 0x4, offset = 0x4, fixed_abs, tag = 'smem constant byte address 0x4 - core index']
  #allocation1 [shape = 'u32[144,128]{1,0:T(1,128)}', space=vmem, size = 0x12000, scoped, tag = 'internal scratch']
  #allocation2 [shape = 'f32[1,1]{1,0:T(1,128)S(1)}', space=vmem, size = 0x200, scoped, tag = 'scoped memory for tpu_custom_call.1']
  %s0 = inlined_call_operand.vmem [shape: bf16[2,5,4,32], index: 0, kind: input, shape index: {}]
  %s1 = inlined_call_operand.vmem [shape: f32[2,5,4,1], index: 1, kind: input, shape index: {}]
  %s2 = inlined_call_operand.vmem [shape: f32[2,1,5], index: 2, kind: input, shape index: {}]
  %s3 = inlined_call_operand.vmem [shape: bf16[2,8,32], index: 3, kind: input, shape index: {}]
  %s4 = inlined_call_operand.hbm [shape: f32[2,1,8], index: 4, kind: input, shape index: {}]
  %s5 = inlined_call_operand.vmem [shape: bf16[2,6,32], index: 5, kind: input, shape index: {}]
  %s6 = inlined_call_operand.vmem [shape: bf16[2,32,96], index: 6, kind: input, shape index: {}]
  %s7 = inlined_call_operand.vmem [shape: f32[2,1,96], index: 7, kind: input, shape index: {}]
  %s8 = inlined_call_operand.vmem [shape: bf16[2,32,32], index: 8, kind: input, shape index: {}]
  %s9 = inlined_call_operand.vmem [shape: f32[2,1,32], index: 9, kind: input, shape index: {}]
  %s10 = inlined_call_operand.vmem [shape: bf16[32,32], index: 10, kind: input, shape index: {}]
  %s11 = inlined_call_operand.vmem [shape: bf16[64,32], index: 11, kind: input, shape index: {}]
  %s12 = inlined_call_operand.vmem [shape: f32[1,32], index: 12, kind: input, shape index: {}]
  %s13 = inlined_call_operand.vmem [shape: f32[1,32], index: 13, kind: input, shape index: {}]
  %s14 = inlined_call_operand.<no memory space> [shape: f32[1,1], index: 14, kind: input, shape index: {}]
  %s15 = inlined_call_operand.hbm [shape: f32[2,1,5], index: 15, kind: output, shape index: {}]
  %s16 = sld [smem:[#allocation0]]
  $region97: #{tpu_custom_call.1} parent=0
    _
  %s18 = ssub.s32 1, %s16
  %s19 = scalar_select 0, %s18, %s16
  %v20 = vstv %s14
  %21 = vst [vmem:[#allocation2] sm:$0x1] %v20
  $region1: #{tpu_custom_call.1} parent=0
    #allocation3 [shape = 'u8[1024]{0}', space=vmem, size = 0x400, scoped, tag = 'input window, operand 4']
    #allocation4 [shape = 's32[2]{0}', space=sflag, size = 0x8, scoped, tag = 'scoped memory for tpu_custom_call.1']
    #allocation5 [shape = 's32[2]{0}', space=sflag, size = 0x8, scoped, tag = 'scoped memory for tpu_custom_call.1']
    #allocation6 [shape = 'u8[1024]{0}', space=vmem, size = 0x400, scoped, tag = 'output window, operand 0']
    %22 = vsyncpa [#allocation4], 0
    %s23 = scalar_lea.sflag [#allocation4], 1
    %24 = vsyncpa %s23, 0
    %25 = vsyncpa [#allocation5], 0
    %s26 = scalar_lea.sflag [#allocation5], 1
    %27 = vsyncpa %s26, 0
    loop: start=0, step=1, limit=4
    $region2: #{tpu_custom_call.1} parent=1 // loop_pre_header
      _
    $region3: #{tpu_custom_call.1} parent=1 // loop_header
      %s29 = sphi 0, %s33
      %p30 = scmp.ge.s32.totalorder %s29, 4
      %s39 = sphi 0, %s41
      %s42 = sphi 0, %s39
      %s43 = sphi 0, %s42
      %s59 = sphi 0, %s43
      %s65 = sphi 0, %s67
      %s68 = sphi 0, %s65
      %s69 = sphi 0, %s68
      %s85 = sphi 0, %s69
      %s91 = sphi 0, %s93
      %s94 = sphi 0, %s91
      %s95 = sphi 0, %s94
      %s111 = sphi 0, %s95
      %s117 = sphi 0, %s119
      %s120 = sphi 0, %s117
      %s121 = sphi 0, %s120
      %s137 = sphi 0, %s121
      %s143 = sphi 0, %s145
      %s146 = sphi 0, %s143
      %s147 = sphi 0, %s146
      %s163 = sphi 0, %s147
      %s169 = sphi 0, %s171
      %s172 = sphi 0, %s169
      %s173 = sphi 0, %s172
      %s189 = sphi 0, %s173
      %s193 = sphi 0, %s193
      %s195 = sphi 0, %s193
      %s196 = sphi 0, %s195
      %s210 = sphi 0, %s196
      %s214 = sphi 0, %s214
      %s216 = sphi 0, %s214
      %s217 = sphi 0, %s216
      %s231 = sphi 0, %s217
      %s235 = sphi 0, %s235
      %s237 = sphi 0, %s235
      %s238 = sphi 0, %s237
      %s252 = sphi 0, %s238
      %s256 = sphi 0, %s256
      %s258 = sphi 0, %s256
      %s259 = sphi 0, %s258
      %s273 = sphi 0, %s259
      %s277 = sphi 0, %s277
      %s279 = sphi 0, %s277
      %s280 = sphi 0, %s279
      %s294 = sphi 0, %s280
      %s298 = sphi 0, %s298
      %s300 = sphi 0, %s298
      %s301 = sphi 0, %s300
      %s315 = sphi 0, %s301
      %s319 = sphi 0, %s319
      %s321 = sphi 0, %s319
      %s322 = sphi 0, %s321
      %s336 = sphi 0, %s322
      %s340 = sphi 0, %s340
      %s342 = sphi 0, %s340
      %s343 = sphi 0, %s342
      %s357 = sphi 0, %s343
      %s361 = sphi 0, %s361
      %s363 = sphi 0, %s361
      %s364 = sphi 0, %s363
      %s378 = sphi 0, %s364
      %s384 = sphi 0, %s386
      %s387 = sphi 0, %s384
      %s388 = sphi 0, %s387
      %s404 = sphi 0, %s388
    $region4: #{tpu_custom_call.1} parent=1 // loop_header_branch
      %32 = sbr.rel (%p30) target = $region8
    $region5: #{tpu_custom_call.1} parent=1 // loop_body
      %s34 = ssub.s32 %s29, 1
      %s35 = ssub.s32 %s29, 2
      %s36 = sadd.s32 %s29, 1
      %s37 = ssub.s32 %s29, %s36
      %p38 = scmp.eq.s32.totalorder %s37, 0
      %s40 = sadd.s32 %s39, 1
      %s41 = scalar_select %p38, %s39, %s40
      %p44 = pneg %p38
      %p45 = scmp.eq.s32.totalorder %s29, 1
      %p46 = por %p44, %p45
      %p47 = scmp.ne.s32.totalorder %s39, %s42
      %p48 = scmp.eq.s32.totalorder %s29, 0
      %p49 = por %p47, %p48
      %p50 = scmp.ne.s32.totalorder %s39, %s42
      %p51 = scmp.eq.s32.totalorder %s34, 1
      %p52 = por %p50, %p51
      %p53 = scmp.ne.s32.totalorder %s42, %s43
      %p54 = scmp.eq.s32.totalorder %s34, 0
      %p55 = por %p53, %p54
      %p56 = scmp.ne.s32.totalorder %s42, %s43
      %p57 = scmp.eq.s32.totalorder %s35, 1
      %p58 = por %p56, %p57
      %p60 = scmp.ne.s32.totalorder %s43, %s59
      %p61 = scmp.eq.s32.totalorder %s35, 0
      %p62 = por %p60, %p61
      %s63 = ssub.s32 %s29, %s36
      %p64 = scmp.eq.s32.totalorder %s63, 0
      %s66 = sadd.s32 %s65, 1
      %s67 = scalar_select %p64, %s65, %s66
      %p70 = pneg %p64
      %p71 = scmp.eq.s32.totalorder %s29, 1
      %p72 = por %p70, %p71
      %p73 = scmp.ne.s32.totalorder %s65, %s68
      %p74 = scmp.eq.s32.totalorder %s29, 0
      %p75 = por %p73, %p74
      %p76 = scmp.ne.s32.totalorder %s65, %s68
      %p77 = scmp.eq.s32.totalorder %s34, 1
      %p78 = por %p76, %p77
      %p79 = scmp.ne.s32.totalorder %s68, %s69
      %p80 = scmp.eq.s32.totalorder %s34, 0
      %p81 = por %p79, %p80
      %p82 = scmp.ne.s32.totalorder %s68, %s69
      %p83 = scmp.eq.s32.totalorder %s35, 1
      %p84 = por %p82, %p83
      %p86 = scmp.ne.s32.totalorder %s69, %s85
      %p87 = scmp.eq.s32.totalorder %s35, 0
      %p88 = por %p86, %p87
      %s89 = ssub.s32 %s29, %s36
      %p90 = scmp.eq.s32.totalorder %s89, 0
      %s92 = sadd.s32 %s91, 1
      %s93 = scalar_select %p90, %s91, %s92
      %p96 = pneg %p90
      %p97 = scmp.eq.s32.totalorder %s29, 1
      %p98 = por %p96, %p97
      %p99 = scmp.ne.s32.totalorder %s91, %s94
      %p100 = scmp.eq.s32.totalorder %s29, 0
      %p101 = por %p99, %p100
      %p102 = scmp.ne.s32.totalorder %s91, %s94
      %p103 = scmp.eq.s32.totalorder %s34, 1
      %p104 = por %p102, %p103
      %p105 = scmp.ne.s32.totalorder %s94, %s95
      %p106 = scmp.eq.s32.totalorder %s34, 0
      %p107 = por %p105, %p106
      %p108 = scmp.ne.s32.totalorder %s94, %s95
      %p109 = scmp.eq.s32.totalorder %s35, 1
      %p110 = por %p108, %p109
      %p112 = scmp.ne.s32.totalorder %s95, %s111
      %p113 = scmp.eq.s32.totalorder %s35, 0
      %p114 = por %p112, %p113
      %s115 = ssub.s32 %s29, %s36
      %p116 = scmp.eq.s32.totalorder %s115, 0
      %s118 = sadd.s32 %s117, 1
      %s119 = scalar_select %p116, %s117, %s118
      %p122 = pneg %p116
      %p123 = scmp.eq.s32.totalorder %s29, 1
      %p124 = por %p122, %p123
      %p125 = scmp.ne.s32.totalorder %s117, %s120
      %p126 = scmp.eq.s32.totalorder %s29, 0
      %p127 = por %p125, %p126
      %p128 = scmp.ne.s32.totalorder %s117, %s120
      %p129 = scmp.eq.s32.totalorder %s34, 1
      %p130 = por %p128, %p129
      %p131 = scmp.ne.s32.totalorder %s120, %s121
      %p132 = scmp.eq.s32.totalorder %s34, 0
      %p133 = por %p131, %p132
      %p134 = scmp.ne.s32.totalorder %s120, %s121
      %p135 = scmp.eq.s32.totalorder %s35, 1
      %p136 = por %p134, %p135
      %p138 = scmp.ne.s32.totalorder %s121, %s137
      %p139 = scmp.eq.s32.totalorder %s35, 0
      %p140 = por %p138, %p139
      %s141 = ssub.s32 %s29, %s36
      %p142 = scmp.eq.s32.totalorder %s141, 0
      %s144 = sadd.s32 %s143, 1
      %s145 = scalar_select %p142, %s143, %s144
      %p148 = pneg %p142
      %p149 = scmp.eq.s32.totalorder %s29, 1
      %p150 = por %p148, %p149
      %p151 = scmp.ne.s32.totalorder %s143, %s146
      %p152 = scmp.eq.s32.totalorder %s29, 0
      %p153 = por %p151, %p152
      %p154 = scmp.ne.s32.totalorder %s143, %s146
      %p155 = scmp.eq.s32.totalorder %s34, 1
      %p156 = por %p154, %p155
      %p157 = scmp.ne.s32.totalorder %s146, %s147
      %p158 = scmp.eq.s32.totalorder %s34, 0
      %p159 = por %p157, %p158
      %p160 = scmp.ne.s32.totalorder %s146, %s147
      %p161 = scmp.eq.s32.totalorder %s35, 1
      %p162 = por %p160, %p161
      %p164 = scmp.ne.s32.totalorder %s147, %s163
      %p165 = scmp.eq.s32.totalorder %s35, 0
      %p166 = por %p164, %p165
      %s167 = ssub.s32 %s29, %s36
      %p168 = scmp.eq.s32.totalorder %s167, 0
      %s170 = sadd.s32 %s169, 1
      %s171 = scalar_select %p168, %s169, %s170
      %p174 = pneg %p168
      %p175 = scmp.eq.s32.totalorder %s29, 1
      %p176 = por %p174, %p175
      %p177 = scmp.ne.s32.totalorder %s169, %s172
      %p178 = scmp.eq.s32.totalorder %s29, 0
      %p179 = por %p177, %p178
      %p180 = scmp.ne.s32.totalorder %s169, %s172
      %p181 = scmp.eq.s32.totalorder %s34, 1
      %p182 = por %p180, %p181
      %p183 = scmp.ne.s32.totalorder %s172, %s173
      %p184 = scmp.eq.s32.totalorder %s34, 0
      %p185 = por %p183, %p184
      %p186 = scmp.ne.s32.totalorder %s172, %s173
      %p187 = scmp.eq.s32.totalorder %s35, 1
      %p188 = por %p186, %p187
      %p190 = scmp.ne.s32.totalorder %s173, %s189
      %p191 = scmp.eq.s32.totalorder %s35, 0
      %p192 = por %p190, %p191
      %s194 = sadd.s32 %s193, 1
      %p197 = scmp.eq.s32.totalorder %s29, 1
      %p198 = scmp.ne.s32.totalorder %s193, %s195
      %p199 = scmp.eq.s32.totalorder %s29, 0
      %p200 = por %p198, %p199
      %p201 = scmp.ne.s32.totalorder %s193, %s195
      %p202 = scmp.eq.s32.totalorder %s34, 1
      %p203 = por %p201, %p202
      %p204 = scmp.ne.s32.totalorder %s195, %s196
      %p205 = scmp.eq.s32.totalorder %s34, 0
      %p206 = por %p204, %p205
      %p207 = scmp.ne.s32.totalorder %s195, %s196
      %p208 = scmp.eq.s32.totalorder %s35, 1
      %p209 = por %p207, %p208
      %p211 = scmp.ne.s32.totalorder %s196, %s210
      %p212 = scmp.eq.s32.totalorder %s35, 0
      %p213 = por %p211, %p212
      %s215 = sadd.s32 %s214, 1
      %p218 = scmp.eq.s32.totalorder %s29, 1
      %p219 = scmp.ne.s32.totalorder %s214, %s216
      %p220 = scmp.eq.s32.totalorder %s29, 0
      %p221 = por %p219, %p220
      %p222 = scmp.ne.s32.totalorder %s214, %s216
      %p223 = scmp.eq.s32.totalorder %s34, 1
      %p224 = por %p222, %p223
      %p225 = scmp.ne.s32.totalorder %s216, %s217
      %p226 = scmp.eq.s32.totalorder %s34, 0
      %p227 = por %p225, %p226
      %p228 = scmp.ne.s32.totalorder %s216, %s217
      %p229 = scmp.eq.s32.totalorder %s35, 1
      %p230 = por %p228, %p229
      %p232 = scmp.ne.s32.totalorder %s217, %s231
      %p233 = scmp.eq.s32.totalorder %s35, 0
      %p234 = por %p232, %p233
      %s236 = sadd.s32 %s235, 1
      %p239 = scmp.eq.s32.totalorder %s29, 1
      %p240 = scmp.ne.s32.totalorder %s235, %s237
      %p241 = scmp.eq.s32.totalorder %s29, 0
      %p242 = por %p240, %p241
      %p243 = scmp.ne.s32.totalorder %s235, %s237
      %p244 = scmp.eq.s32.totalorder %s34, 1
      %p245 = por %p243, %p244
      %p246 = scmp.ne.s32.totalorder %s237, %s238
      %p247 = scmp.eq.s32.totalorder %s34, 0
      %p248 = por %p246, %p247
      %p249 = scmp.ne.s32.totalorder %s237, %s238
      %p250 = scmp.eq.s32.totalorder %s35, 1
      %p251 = por %p249, %p250
      %p253 = scmp.ne.s32.totalorder %s238, %s252
      %p254 = scmp.eq.s32.totalorder %s35, 0
      %p255 = por %p253, %p254
      %s257 = sadd.s32 %s256, 1
      %p260 = scmp.eq.s32.totalorder %s29, 1
      %p261 = scmp.ne.s32.totalorder %s256, %s258
      %p262 = scmp.eq.s32.totalorder %s29, 0
      %p263 = por %p261, %p262
      %p264 = scmp.ne.s32.totalorder %s256, %s258
      %p265 = scmp.eq.s32.totalorder %s34, 1
      %p266 = por %p264, %p265
      %p267 = scmp.ne.s32.totalorder %s258, %s259
      %p268 = scmp.eq.s32.totalorder %s34, 0
      %p269 = por %p267, %p268
      %p270 = scmp.ne.s32.totalorder %s258, %s259
      %p271 = scmp.eq.s32.totalorder %s35, 1
      %p272 = por %p270, %p271
      %p274 = scmp.ne.s32.totalorder %s259, %s273
      %p275 = scmp.eq.s32.totalorder %s35, 0
      %p276 = por %p274, %p275
      %s278 = sadd.s32 %s277, 1
      %p281 = scmp.eq.s32.totalorder %s29, 1
      %p282 = scmp.ne.s32.totalorder %s277, %s279
      %p283 = scmp.eq.s32.totalorder %s29, 0
      %p284 = por %p282, %p283
      %p285 = scmp.ne.s32.totalorder %s277, %s279
      %p286 = scmp.eq.s32.totalorder %s34, 1
      %p287 = por %p285, %p286
      %p288 = scmp.ne.s32.totalorder %s279, %s280
      %p289 = scmp.eq.s32.totalorder %s34, 0
      %p290 = por %p288, %p289
      %p291 = scmp.ne.s32.totalorder %s279, %s280
      %p292 = scmp.eq.s32.totalorder %s35, 1
      %p293 = por %p291, %p292
      %p295 = scmp.ne.s32.totalorder %s280, %s294
      %p296 = scmp.eq.s32.totalorder %s35, 0
      %p297 = por %p295, %p296
      %s299 = sadd.s32 %s298, 1
      %p302 = scmp.eq.s32.totalorder %s29, 1
      %p303 = scmp.ne.s32.totalorder %s298, %s300
      %p304 = scmp.eq.s32.totalorder %s29, 0
      %p305 = por %p303, %p304
      %p306 = scmp.ne.s32.totalorder %s298, %s300
      %p307 = scmp.eq.s32.totalorder %s34, 1
      %p308 = por %p306, %p307
      %p309 = scmp.ne.s32.totalorder %s300, %s301
      %p310 = scmp.eq.s32.totalorder %s34, 0
      %p311 = por %p309, %p310
      %p312 = scmp.ne.s32.totalorder %s300, %s301
      %p313 = scmp.eq.s32.totalorder %s35, 1
      %p314 = por %p312, %p313
      %p316 = scmp.ne.s32.totalorder %s301, %s315
      %p317 = scmp.eq.s32.totalorder %s35, 0
      %p318 = por %p316, %p317
      %s320 = sadd.s32 %s319, 1
      %p323 = scmp.eq.s32.totalorder %s29, 1
      %p324 = scmp.ne.s32.totalorder %s319, %s321
      %p325 = scmp.eq.s32.totalorder %s29, 0
      %p326 = por %p324, %p325
      %p327 = scmp.ne.s32.totalorder %s319, %s321
      %p328 = scmp.eq.s32.totalorder %s34, 1
      %p329 = por %p327, %p328
      %p330 = scmp.ne.s32.totalorder %s321, %s322
      %p331 = scmp.eq.s32.totalorder %s34, 0
      %p332 = por %p330, %p331
      %p333 = scmp.ne.s32.totalorder %s321, %s322
      %p334 = scmp.eq.s32.totalorder %s35, 1
      %p335 = por %p333, %p334
      %p337 = scmp.ne.s32.totalorder %s322, %s336
      %p338 = scmp.eq.s32.totalorder %s35, 0
      %p339 = por %p337, %p338
      %s341 = sadd.s32 %s340, 1
      %p344 = scmp.eq.s32.totalorder %s29, 1
      %p345 = scmp.ne.s32.totalorder %s340, %s342
      %p346 = scmp.eq.s32.totalorder %s29, 0
      %p347 = por %p345, %p346
      %p348 = scmp.ne.s32.totalorder %s340, %s342
      %p349 = scmp.eq.s32.totalorder %s34, 1
      %p350 = por %p348, %p349
      %p351 = scmp.ne.s32.totalorder %s342, %s343
      %p352 = scmp.eq.s32.totalorder %s34, 0
      %p353 = por %p351, %p352
      %p354 = scmp.ne.s32.totalorder %s342, %s343
      %p355 = scmp.eq.s32.totalorder %s35, 1
      %p356 = por %p354, %p355
      %p358 = scmp.ne.s32.totalorder %s343, %s357
      %p359 = scmp.eq.s32.totalorder %s35, 0
      %p360 = por %p358, %p359
      %s362 = sadd.s32 %s361, 1
      %p365 = scmp.eq.s32.totalorder %s29, 1
      %p366 = scmp.ne.s32.totalorder %s361, %s363
      %p367 = scmp.eq.s32.totalorder %s29, 0
      %p368 = por %p366, %p367
      %p369 = scmp.ne.s32.totalorder %s361, %s363
      %p370 = scmp.eq.s32.totalorder %s34, 1
      %p371 = por %p369, %p370
      %p372 = scmp.ne.s32.totalorder %s363, %s364
      %p373 = scmp.eq.s32.totalorder %s34, 0
      %p374 = por %p372, %p373
      %p375 = scmp.ne.s32.totalorder %s363, %s364
      %p376 = scmp.eq.s32.totalorder %s35, 1
      %p377 = por %p375, %p376
      %p379 = scmp.ne.s32.totalorder %s364, %s378
      %p380 = scmp.eq.s32.totalorder %s35, 0
      %p381 = por %p379, %p380
      %s382 = ssub.s32 %s29, %s36
      %p383 = scmp.eq.s32.totalorder %s382, 0
      %s385 = sadd.s32 %s384, 1
      %s386 = scalar_select %p383, %s384, %s385
      %p389 = pneg %p383
      %p390 = scmp.eq.s32.totalorder %s29, 1
      %p391 = por %p389, %p390
      %p392 = scmp.ne.s32.totalorder %s384, %s387
      %p393 = scmp.eq.s32.totalorder %s29, 0
      %p394 = por %p392, %p393
      %p395 = scmp.ne.s32.totalorder %s384, %s387
      %p396 = scmp.eq.s32.totalorder %s34, 1
      %p397 = por %p395, %p396
      %p398 = scmp.ne.s32.totalorder %s387, %s388
      %p399 = scmp.eq.s32.totalorder %s34, 0
      %p400 = por %p398, %p399
      %p401 = scmp.ne.s32.totalorder %s387, %s388
      %p402 = scmp.eq.s32.totalorder %s35, 1
      %p403 = por %p401, %p402
      %p405 = scmp.ne.s32.totalorder %s388, %s404
      %p406 = scmp.eq.s32.totalorder %s35, 0
      %p407 = por %p405, %p406
      %p408 = scmp.le.s32.totalorder 1, %s29
      %p409 = scmp.lt.s32.totalorder %s29, 3
      %p410 = pnand %p408, %p409
      %p411 = pneg %p410
      // Predicated region
      $region9: #{tpu_custom_call.1} parent=5 // pred_check
        _
      $region10: #{tpu_custom_call.1} parent=5 // pred_check_branch
        %413 = sbr.rel (%p410) target = $region12
      $region11: #{tpu_custom_call.1} parent=5 // pred_region
        %s414 = ssub.s32 %s29, 1
        // Predicated region
        $region13: #{tpu_custom_call.1} parent=11 // pred_check
          %p415 = pneg %p206
        $region14: #{tpu_custom_call.1} parent=11 // pred_check_branch
          %417 = sbr.rel (%p415) target = $region16
        $region15: #{tpu_custom_call.1} parent=11 // pred_region
          _
        $region16: #{tpu_custom_call.1} parent=11 // pred_fallthru
          _
        // Predicated region
        $region17: #{tpu_custom_call.1} parent=11 // pred_check
          %p418 = pneg %p227
        $region18: #{tpu_custom_call.1} parent=11 // pred_check_branch
          %420 = sbr.rel (%p418) target = $region20
        $region19: #{tpu_custom_call.1} parent=11 // pred_region
          _
        $region20: #{tpu_custom_call.1} parent=11 // pred_fallthru
          _
        // Predicated region
        $region21: #{tpu_custom_call.1} parent=11 // pred_check
          %p421 = pneg %p248
        $region22: #{tpu_custom_call.1} parent=11 // pred_check_branch
          %423 = sbr.rel (%p421) target = $region24
        $region23: #{tpu_custom_call.1} parent=11 // pred_region
          _
        $region24: #{tpu_custom_call.1} parent=11 // pred_fallthru
          _
        // Predicated region
        $region25: #{tpu_custom_call.1} parent=11 // pred_check
          %p424 = pneg %p269
        $region26: #{tpu_custom_call.1} parent=11 // pred_check_branch
          %426 = sbr.rel (%p424) target = $region28
        $region27: #{tpu_custom_call.1} parent=11 // pred_region
          _
        $region28: #{tpu_custom_call.1} parent=11 // pred_fallthru
          _
        // Predicated region
        $region29: #{tpu_custom_call.1} parent=11 // pred_check
          %p427 = pneg %p290
        $region30: #{tpu_custom_call.1} parent=11 // pred_check_branch
          %429 = sbr.rel (%p427) target = $region32
        $region31: #{tpu_custom_call.1} parent=11 // pred_region
          _
        $region32: #{tpu_custom_call.1} parent=11 // pred_fallthru
          _
        // Predicated region
        $region33: #{tpu_custom_call.1} parent=11 // pred_check
          %p430 = pneg %p311
        $region34: #{tpu_custom_call.1} parent=11 // pred_check_branch
          %432 = sbr.rel (%p430) target = $region36
        $region35: #{tpu_custom_call.1} parent=11 // pred_region
          _
        $region36: #{tpu_custom_call.1} parent=11 // pred_fallthru
          _
        // Predicated region
        $region37: #{tpu_custom_call.1} parent=11 // pred_check
          %p433 = pneg %p332
        $region38: #{tpu_custom_call.1} parent=11 // pred_check_branch
          %435 = sbr.rel (%p433) target = $region40
        $region39: #{tpu_custom_call.1} parent=11 // pred_region
          _
        $region40: #{tpu_custom_call.1} parent=11 // pred_fallthru
          _
        // Predicated region
        $region41: #{tpu_custom_call.1} parent=11 // pred_check
          %p436 = pneg %p353
        $region42: #{tpu_custom_call.1} parent=11 // pred_check_branch
          %438 = sbr.rel (%p436) target = $region44
        $region43: #{tpu_custom_call.1} parent=11 // pred_region
          _
        $region44: #{tpu_custom_call.1} parent=11 // pred_fallthru
          _
        // Predicated region
        $region45: #{tpu_custom_call.1} parent=11 // pred_check
          %p439 = pneg %p374
        $region46: #{tpu_custom_call.1} parent=11 // pred_check_branch
          %441 = sbr.rel (%p439) target = $region48
        $region47: #{tpu_custom_call.1} parent=11 // pred_region
          _
        $region48: #{tpu_custom_call.1} parent=11 // pred_fallthru
          _
      $region12: #{tpu_custom_call.1} parent=5 // pred_fallthru
        _
      %p442 = scmp.lt.s32.totalorder %s29, 2
      // Predicated region
      $region49: #{tpu_custom_call.1} parent=5 // pred_check
        %p443 = pneg %p442
      $region50: #{tpu_custom_call.1} parent=5 // pred_check_branch
        %445 = sbr.rel (%p443) target = $region52
      $region51: #{tpu_custom_call.1} parent=5 // pred_region
        // Predicated region
        $region53: #{tpu_custom_call.1} parent=51 // pred_check
          %p446 = pneg %p49
        $region54: #{tpu_custom_call.1} parent=51 // pred_check_branch
          %448 = sbr.rel (%p446) target = $region56
        $region55: #{tpu_custom_call.1} parent=51 // pred_region
          %p449 = scmp.lt.s32.totalorder %s29, 1
          %s450 = scalar_select %p449, %s29, 1
          %s451 = smul.addr %s450, 5
          %s452 = smul.addr %s451, 2
          %s453 = scalar_lea.vmem %s0, %s452
        $region56: #{tpu_custom_call.1} parent=51 // pred_fallthru
          _
        // Predicated region
        $region57: #{tpu_custom_call.1} parent=51 // pred_check
          %p454 = pneg %p75
        $region58: #{tpu_custom_call.1} parent=51 // pred_check_branch
          %456 = sbr.rel (%p454) target = $region60
        $region59: #{tpu_custom_call.1} parent=51 // pred_region
          %p457 = scmp.lt.s32.totalorder %s29, 1
          %s458 = scalar_select %p457, %s29, 1
          %s459 = smul.addr %s458, 5
          %s460 = smul.addr %s459, 4
          %s461 = scalar_lea.vmem %s1, %s460
        $region60: #{tpu_custom_call.1} parent=51 // pred_fallthru
          _
        // Predicated region
        $region61: #{tpu_custom_call.1} parent=51 // pred_check
          %p462 = pneg %p101
        $region62: #{tpu_custom_call.1} parent=51 // pred_check_branch
          %464 = sbr.rel (%p462) target = $region64
        $region63: #{tpu_custom_call.1} parent=51 // pred_region
          %p465 = scmp.lt.s32.totalorder %s29, 1
          %s466 = scalar_select %p465, %s29, 1
          %s467 = scalar_lea.vmem %s2, %s466
        $region64: #{tpu_custom_call.1} parent=51 // pred_fallthru
          _
        // Predicated region
        $region65: #{tpu_custom_call.1} parent=51 // pred_check
          %p468 = pneg %p127
        $region66: #{tpu_custom_call.1} parent=51 // pred_check_branch
          %470 = sbr.rel (%p468) target = $region68
        $region67: #{tpu_custom_call.1} parent=51 // pred_region
          %p471 = scmp.lt.s32.totalorder %s29, 1
          %s472 = scalar_select %p471, %s29, 1
          %s473 = smul.addr %s472, 4
          %s474 = scalar_lea.vmem %s3, %s473
        $region68: #{tpu_custom_call.1} parent=51 // pred_fallthru
          _
        // Predicated region
        $region69: #{tpu_custom_call.1} parent=51 // pred_check
          %p475 = pneg %p153
        $region70: #{tpu_custom_call.1} parent=51 // pred_check_branch
          %477 = sbr.rel (%p475) target = $region72
        $region71: #{tpu_custom_call.1} parent=51 // pred_region
          %s478 = sand.u32 %s143, 1
          %s479 = scalar_lea.sflag [#allocation4], %s478
          %s480 = sand.u32 %s143, 1
          %s481 = scalar_lea.vmem [#allocation3], %s480
          %s483 = ssub.s32 16, 16
          %484 = vsyncadd %s479, %s483
          %s485 = smul.addr %s29, 16
          %s486 = scalar_lea.hbm %s4, %s485
          %s488 = sshll.u32 %s481, 4
          %s489 = int_to_ptr.vmem [resolvable:$true] %s488
          %491 = dma.hbm_to_vmem [thread:$0]  %s486, 16, %s489, %s479
        $region72: #{tpu_custom_call.1} parent=51 // pred_fallthru
          _
        // Predicated region
        $region73: #{tpu_custom_call.1} parent=51 // pred_check
          %p492 = pneg %p179
        $region74: #{tpu_custom_call.1} parent=51 // pred_check_branch
          %494 = sbr.rel (%p492) target = $region76
        $region75: #{tpu_custom_call.1} parent=51 // pred_region
          %p495 = scmp.lt.s32.totalorder %s29, 1
          %s496 = scalar_select %p495, %s29, 1
          %s497 = smul.addr %s496, 4
          %s498 = scalar_lea.vmem %s5, %s497
        $region76: #{tpu_custom_call.1} parent=51 // pred_fallthru
          _
      $region52: #{tpu_custom_call.1} parent=5 // pred_fallthru
        _
      %p499 = scmp.le.s32.totalorder 1, %s29
      %p500 = scmp.lt.s32.totalorder %s29, 3
      %p501 = pnand %p499, %p500
      %p502 = pneg %p501
      // Predicated region
      $region77: #{tpu_custom_call.1} parent=5 // pred_check
        _
      $region78: #{tpu_custom_call.1} parent=5 // pred_check_branch
        %504 = sbr.rel (%p501) target = $region80
      $region79: #{tpu_custom_call.1} parent=5 // pred_region
        %s505 = ssub.s32 %s29, 1
        %s506 = sand.u32 %s146, 1
        %s507 = scalar_lea.sflag [#allocation4], %s506
        %s508 = sand.u32 %s146, 1
        %s509 = scalar_lea.vmem [#allocation3], %s508
        // Predicated region
        $region81: #{tpu_custom_call.1} parent=79 // pred_check
          %p510 = pneg %p159
        $region82: #{tpu_custom_call.1} parent=79 // pred_check_branch
          %512 = sbr.rel (%p510) target = $region84
        $region83: #{tpu_custom_call.1} parent=79 // pred_region
          %513 = dma.done %s507, 16
        $region84: #{tpu_custom_call.1} parent=79 // pred_fallthru
          _
        %p514 = scmp.lt.s32.totalorder %s34, 1
        %s515 = scalar_select %p514, %s34, 1
        %s516 = smul.addr %s515, 5
        %s517 = smul.addr %s516, 2
        %s518 = scalar_lea.vmem %s0, %s517
        %p519 = pneg %p55
        %p520 = pneg %p52
        %p521 = scmp.lt.s32.totalorder %s34, 1
        %s522 = scalar_select %p521, %s34, 1
        %s523 = smul.addr %s522, 5
        %s524 = smul.addr %s523, 4
        %s525 = scalar_lea.vmem %s1, %s524
        %p526 = pneg %p81
        %p527 = pneg %p78
        %p528 = scmp.lt.s32.totalorder %s34, 1
        %s529 = scalar_select %p528, %s34, 1
        %s530 = scalar_lea.vmem %s2, %s529
        %p531 = pneg %p107
        %p532 = pneg %p104
        %p533 = scmp.lt.s32.totalorder %s34, 1
        %s534 = scalar_select %p533, %s34, 1
        %s535 = smul.addr %s534, 4
        %s536 = scalar_lea.vmem %s3, %s535
        %p537 = pneg %p133
        %p538 = pneg %p130
        %s539 = sand.u32 %s146, 1
        %s540 = scalar_lea.sflag [#allocation4], %s539
        %s541 = sand.u32 %s146, 1
        %s542 = scalar_lea.vmem [#allocation3], %s541
        %p543 = pneg %p159
        %p544 = pneg %p156
        %p545 = scmp.lt.s32.totalorder %s34, 1
        %s546 = scalar_select %p545, %s34, 1
        %s547 = smul.addr %s546, 4
        %s548 = scalar_lea.vmem %s5, %s547
        %p549 = pneg %p185
        %p550 = pneg %p182
        %p551 = pneg %p206
        %p552 = pneg %p203
        %p553 = pneg %p227
        %p554 = pneg %p224
        %p555 = pneg %p248
        %p556 = pneg %p245
        %p557 = pneg %p269
        %p558 = pneg %p266
        %p559 = pneg %p290
        %p560 = pneg %p287
        %p561 = pneg %p311
        %p562 = pneg %p308
        %p563 = pneg %p332
        %p564 = pneg %p329
        %p565 = pneg %p353
        %p566 = pneg %p350
        %p567 = pneg %p374
        %p568 = pneg %p371
        %p569 = pneg %p400
        %p570 = pneg %p397
        %s571 = sand.u32 %s387, 1
        %s572 = scalar_lea.sflag [#allocation5], %s571
        %s573 = sand.u32 %s387, 1
        %s574 = scalar_lea.vmem [#allocation6], %s573
        %p575 = scmp.lt.s32.totalorder %s34, 1
        %s576 = scalar_select %p575, %s34, 1
        %s577 = smul.addr %s576, 5
        %s578 = smul.addr %s577, 2
        %s579 = scalar_lea.vmem %s0, %s578
        %p580 = scmp.lt.s32.totalorder %s34, 1
        %s581 = scalar_select %p580, %s34, 1
        %s582 = smul.addr %s581, 5
        %s583 = smul.addr %s582, 4
        %s584 = scalar_lea.vmem %s1, %s583
        %p585 = scmp.lt.s32.totalorder %s34, 1
        %s586 = scalar_select %p585, %s34, 1
        %s587 = scalar_lea.vmem %s2, %s586
        %p588 = scmp.lt.s32.totalorder %s34, 1
        %s589 = scalar_select %p588, %s34, 1
        %s590 = smul.addr %s589, 4
        %s591 = scalar_lea.vmem %s3, %s590
        %p592 = scmp.lt.s32.totalorder %s34, 1
        %s593 = scalar_select %p592, %s34, 1
        %s594 = smul.addr %s593, 4
        %s595 = scalar_lea.vmem %s5, %s594
        %v597 = vld [vmem:[%s579] sm:$0x3]
        %v598 = vld [vmem:[%s579 + $0x2] sm:$0x3]
        %v599 = vld [vmem:[%s579 + $0x4] sm:$0x3]
        %v600 = vld [vmem:[%s579 + $0x6] sm:$0x3]
        %v601 = vld [vmem:[%s579 + $0x8] sm:$0x3]
        %v602 = vunpack.c.l.bf16 %v597
        %v603 = vunpack.c.l.bf16 %v598
        %v604 = vunpack.c.l.bf16 %v599
        %v605 = vunpack.c.l.bf16 %v600
        %v606 = vunpack.c.l.bf16 %v601
        %v607 = vld [vmem:[%s584] sm:$0xf]
        %v608 = vld [vmem:[%s584 + $0x4] sm:$0xf]
        %v609 = vld [vmem:[%s584 + $0x8] sm:$0xf]
        %v610 = vld [vmem:[%s584 + $0xc] sm:$0xf]
        %v611 = vld [vmem:[%s584 + $0x10] sm:$0xf]
        %613 = vset.pattern.permute.xlu0 0
        %614 = vperm.xlu0 %613, %v607
        %v615 = vpop.permute.xlu0 %614
        %618 = vset.pattern.permute.xlu0 0
        %619 = vperm.xlu0 %618, %v608
        %v620 = vpop.permute.xlu0 %619
        %623 = vset.pattern.permute.xlu0 0
        %624 = vperm.xlu0 %623, %v609
        %v625 = vpop.permute.xlu0 %624
        %628 = vset.pattern.permute.xlu0 0
        %629 = vperm.xlu0 %628, %v610
        %v630 = vpop.permute.xlu0 %629
        %633 = vset.pattern.permute.xlu0 0
        %634 = vperm.xlu0 %633, %v611
        %v635 = vpop.permute.xlu0 %634
        %v637 = vmul.f32 %v602, %v615
        %v638 = vmul.f32 %v603, %v620
        %v639 = vmul.f32 %v604, %v625
        %v640 = vmul.f32 %v605, %v630
        %v641 = vmul.f32 %v606, %v635
        %vm642 = vcmask 257024
        %v643 = vsel %vm642, %v637, 0.0
        %v644 = vrot.slane %v643, 4
        %v645 = vadd.f32 %v643, %v644
        %v646 = vrot.slane %v645, 2
        %v647 = vadd.f32 %v645, %v646
        %v648 = vrot.slane %v647, 1
        %v649 = vadd.f32 %v647, %v648
        %v650 = vsel %vm642, %v638, 0.0
        %v651 = vrot.slane %v650, 4
        %v652 = vadd.f32 %v650, %v651
        %v653 = vrot.slane %v652, 2
        %v654 = vadd.f32 %v652, %v653
        %v655 = vrot.slane %v654, 1
        %v656 = vadd.f32 %v654, %v655
        %v657 = vsel %vm642, %v639, 0.0
        %v658 = vrot.slane %v657, 4
        %v659 = vadd.f32 %v657, %v658
        %v660 = vrot.slane %v659, 2
        %v661 = vadd.f32 %v659, %v660
        %v662 = vrot.slane %v661, 1
        %v663 = vadd.f32 %v661, %v662
        %v664 = vsel %vm642, %v640, 0.0
        %v665 = vrot.slane %v664, 4
        %v666 = vadd.f32 %v664, %v665
        %v667 = vrot.slane %v666, 2
        %v668 = vadd.f32 %v666, %v667
        %v669 = vrot.slane %v668, 1
        %v670 = vadd.f32 %v668, %v669
        %v671 = vsel %vm642, %v641, 0.0
        %v672 = vrot.slane %v671, 4
        %v673 = vadd.f32 %v671, %v672
        %v674 = vrot.slane %v673, 2
        %v675 = vadd.f32 %v673, %v674
        %v676 = vrot.slane %v675, 1
        %v677 = vadd.f32 %v675, %v676
        %vm678 = vcmask 3072
        %v679 = vsel %vm678, %v607, 0.0
        %v680 = vrot.slane %v679, 4
        %v681 = vadd.f32 %v679, %v680
        %v682 = vrot.slane %v681, 2
        %v683 = vadd.f32 %v681, %v682
        %v684 = vrot.slane %v683, 1
        %v685 = vadd.f32 %v683, %v684
        %v686 = vsel %vm678, %v608, 0.0
        %v687 = vrot.slane %v686, 4
        %v688 = vadd.f32 %v686, %v687
        %v689 = vrot.slane %v688, 2
        %v690 = vadd.f32 %v688, %v689
        %v691 = vrot.slane %v690, 1
        %v692 = vadd.f32 %v690, %v691
        %v693 = vsel %vm678, %v609, 0.0
        %v694 = vrot.slane %v693, 4
        %v695 = vadd.f32 %v693, %v694
        %v696 = vrot.slane %v695, 2
        %v697 = vadd.f32 %v695, %v696
        %v698 = vrot.slane %v697, 1
        %v699 = vadd.f32 %v697, %v698
        %v700 = vsel %vm678, %v610, 0.0
        %v701 = vrot.slane %v700, 4
        %v702 = vadd.f32 %v700, %v701
        %v703 = vrot.slane %v702, 2
        %v704 = vadd.f32 %v702, %v703
        %v705 = vrot.slane %v704, 1
        %v706 = vadd.f32 %v704, %v705
        %v707 = vsel %vm678, %v611, 0.0
        %v708 = vrot.slane %v707, 4
        %v709 = vadd.f32 %v707, %v708
        %v710 = vrot.slane %v709, 2
        %v711 = vadd.f32 %v709, %v710
        %v712 = vrot.slane %v711, 1
        %v713 = vadd.f32 %v711, %v712
        %v714 = vmax.f32 %v685, 1.0
        %v715 = vmax.f32 %v692, 1.0
        %v716 = vmax.f32 %v699, 1.0
        %v717 = vmax.f32 %v706, 1.0
        %v718 = vmax.f32 %v713, 1.0
        %v719 = vrcp.pop %v714
        %v720 = vrcp.pop %v715
        %v721 = vrcp.pop %v716
        %v722 = vrcp.pop %v717
        %v723 = vrcp.pop %v718
        %725 = vset.pattern.permute.xlu0 0
        %726 = vperm.xlu0 %725, %v719
        %v727 = vpop.permute.xlu0 %726
        %730 = vset.pattern.permute.xlu0 0
        %731 = vperm.xlu0 %730, %v720
        %v732 = vpop.permute.xlu0 %731
        %735 = vset.pattern.permute.xlu0 0
        %736 = vperm.xlu0 %735, %v721
        %v737 = vpop.permute.xlu0 %736
        %740 = vset.pattern.permute.xlu0 0
        %741 = vperm.xlu0 %740, %v722
        %v742 = vpop.permute.xlu0 %741
        %745 = vset.pattern.permute.xlu0 0
        %746 = vperm.xlu0 %745, %v723
        %v747 = vpop.permute.xlu0 %746
        %v749 = vmul.f32 %v649, %v727
        %v750 = vmul.f32 %v656, %v732
        %v751 = vmul.f32 %v663, %v737
        %v752 = vmul.f32 %v670, %v742
        %v753 = vmul.f32 %v677, %v747
        %v754 = vld [vmem:[%s6] sm:$0xf]
        %v755 = vld [vmem:[%s6 + $0x4] sm:$0xf]
        %v756 = vld [vmem:[%s6 + $0x8] sm:$0xf]
        %v757 = vld [vmem:[%s6 + $0xc] sm:$0xf]
        %v758 = vld [vmem:[%s7] sm:$0x1]
        %v759 = vld [vmem:[%s8] sm:$0xf]
        %v760 = vld [vmem:[%s8 + $0x4] sm:$0xf]
        %v761 = vld [vmem:[%s8 + $0x8] sm:$0xf]
        %v762 = vld [vmem:[%s8 + $0xc] sm:$0xf]
        %v763 = vld [vmem:[%s9] sm:$0x1]
        %s764 = scalar_lea.vmem %s6, 16
        %v765 = vld [vmem:[%s764] sm:$0xf]
        %v766 = vld [vmem:[%s764 + $0x4] sm:$0xf]
        %v767 = vld [vmem:[%s764 + $0x8] sm:$0xf]
        %v768 = vld [vmem:[%s764 + $0xc] sm:$0xf]
        %s769 = scalar_lea.vmem %s7, 1
        %v770 = vld [vmem:[%s769] sm:$0x1]
        %s771 = scalar_lea.vmem %s8, 16
        %v772 = vld [vmem:[%s771] sm:$0xf]
        %v773 = vld [vmem:[%s771 + $0x4] sm:$0xf]
        %v774 = vld [vmem:[%s771 + $0x8] sm:$0xf]
        %v775 = vld [vmem:[%s771 + $0xc] sm:$0xf]
        %s776 = scalar_lea.vmem %s9, 1
        %v777 = vld [vmem:[%s776] sm:$0x1]
        %v778 = vld [vmem:[%s11] sm:$0xf]
        %v779 = vld [vmem:[%s11 + $0x4] sm:$0xf]
        %v780 = vld [vmem:[%s11 + $0x8] sm:$0xf]
        %v781 = vld [vmem:[%s11 + $0xc] sm:$0xf]
        %v782 = vld [vmem:[%s11 + $0x10] sm:$0xf]
        %v783 = vld [vmem:[%s11 + $0x14] sm:$0xf]
        %v784 = vld [vmem:[%s11 + $0x18] sm:$0xf]
        %v785 = vld [vmem:[%s11 + $0x1c] sm:$0xf]
        %v786 = vld [vmem:[%s10] sm:$0xf]
        %v787 = vld [vmem:[%s10 + $0x4] sm:$0xf]
        %v788 = vld [vmem:[%s10 + $0x8] sm:$0xf]
        %v789 = vld [vmem:[%s10 + $0xc] sm:$0xf]
        %v790 = vld [vmem:[%s509] sm:$0x1]
        %v791 = vsub.f32 %v790, 1.0
        %v792 = vmul.f32 %v791, 1e+30
        %v793 = vld [vmem:[%s591] sm:$0xf]
        %v795 = vlaneseq
        %v796 = vshrl.u32 %v795, 7
        %v797 = vsub.s32 0, %v796
        %v798 = vrot.slane %v758, %v797
        %v804 = vunpack.c.l.b16 %v754
        %v805 = vunpack.c.l.b16 %v755
        %v806 = vunpack.c.l.b16 %v756
        %v807 = vunpack.c.l.b16 %v757
        %v808 = vpack.c.b16 %v805, %v804
        %v809 = vpack.c.b16 %v807, %v806
        %vm812 = vcmask 261120
        %v814 = vsel %vm812, %v793, 0
        %816 = vmatprep.subr.bf16.mxu0 0
        %817 = vmatpush1.bf16.msra.mxu0 %v808
        %818 = vmatprep.subr.bf16.mxu0 0
        %819 = vmatpush1.bf16.msra.mxu0 %v809
        %820 = vmatprep.subr.bf16.mxu0 0
        %821 = vmatpush1.bf16.msra.mxu0 0
        %822 = vmatprep.subr.bf16.mxu0 0
        %823 = vmatpush1.bf16.msra.mxu0 0
        %824 = vmatprep.subr.bf16.mxu0 0
        %825 = vmatpush1.bf16.msra.mxu0 0
        %826 = vmatprep.subr.bf16.mxu0 0
        %827 = vmatpush1.bf16.msra.mxu0 0
        %828 = vmatprep.subr.bf16.mxu0 0
        %829 = vmatpush1.bf16.msra.mxu0 0
        %830 = vmatprep.subr.bf16.mxu0 0
        %831 = vmatpush1.bf16.msra.mxu0 0
        %832 = vmatprep.subr.bf16.mxu0 0
        %833 = vmatpush1.bf16.msra.mxu0 0
        %834 = vmatprep.subr.bf16.mxu0 0
        %835 = vmatpush1.bf16.msra.mxu0 0
        %836 = vmatprep.subr.bf16.mxu0 0
        %837 = vmatpush1.bf16.msra.mxu0 0
        %838 = vmatprep.subr.bf16.mxu0 0
        %839 = vmatpush1.bf16.msra.mxu0 0
        %840 = vmatprep.subr.bf16.mxu0 0
        %841 = vmatpush1.bf16.msra.mxu0 0
        %842 = vmatprep.subr.bf16.mxu0 0
        %843 = vmatpush1.bf16.msra.mxu0 0
        %844 = vmatprep.subr.bf16.mxu0 0
        %845 = vmatpush1.bf16.msra.mxu0 0
        %846 = vmatprep.subr.bf16.mxu0 0
        %847 = vmatpush1.bf16.msra.mxu0 0
        %848 = vmatprep.mubr.bf16.mxu0 0
        %849 = vmatmul.mubr.bf16.gmra.mrb[0].mxu0 %v814
        %v850 = vpop.f32.mrb[0].mxu0
        %v851 = vadd.f32 %v798, %v850
        %v852 = vpop.f32.mrb[0].mxu0
        %v853 = vpop.f32.mrb[0].mxu0
        %v854 = vpop.f32.mrb[0].mxu0
        %855 = vdwg.mxu0
        %v856 = vpack.c.bf16 %v851, %v851
        %v858 = vlaneseq
        %v859 = vshrl.u32 %v858, 7
        %v860 = vsub.s32 0, %v859
        %v861 = vrot.slane %v792, %v860
        %864 = vrot.lane.b32.xlu0 %v856, 96
        %v865 = vpop.permute.xlu0 %864
        %vm866 = vcmask 64512
        %v868 = vsel %vm866, %v856, 0
        %v871 = vsel %vm866, %v865, 0
        %873 = vmatprep.subr.bf16.mxu0 0
        %874 = vmatpush1.bf16.xpose.msra.mxu0 %v871
        %875 = vmatprep.subr.bf16.mxu0 0
        %876 = vmatpush1.bf16.xpose.msra.mxu0 0
        %877 = vmatprep.subr.bf16.mxu0 0
        %878 = vmatpush1.bf16.xpose.msra.mxu0 0
        %879 = vmatprep.subr.bf16.mxu0 0
        %880 = vmatpush1.bf16.xpose.msra.mxu0 0
        %881 = vmatprep.subr.bf16.mxu0 0
        %882 = vmatpush1.bf16.xpose.msra.mxu0 0
        %883 = vmatprep.subr.bf16.mxu0 0
        %884 = vmatpush1.bf16.xpose.msra.mxu0 0
        %885 = vmatprep.subr.bf16.mxu0 0
        %886 = vmatpush1.bf16.xpose.msra.mxu0 0
        %887 = vmatprep.subr.bf16.mxu0 0
        %888 = vmatpush1.bf16.xpose.msra.mxu0 0
        %889 = vmatprep.subr.bf16.mxu0 0
        %890 = vmatpush1.bf16.xpose.msra.mxu0 0
        %891 = vmatprep.subr.bf16.mxu0 0
        %892 = vmatpush1.bf16.xpose.msra.mxu0 0
        %893 = vmatprep.subr.bf16.mxu0 0
        %894 = vmatpush1.bf16.xpose.msra.mxu0 0
        %895 = vmatprep.subr.bf16.mxu0 0
        %896 = vmatpush1.bf16.xpose.msra.mxu0 0
        %897 = vmatprep.subr.bf16.mxu0 0
        %898 = vmatpush1.bf16.xpose.msra.mxu0 0
        %899 = vmatprep.subr.bf16.mxu0 0
        %900 = vmatpush1.bf16.xpose.msra.mxu0 0
        %901 = vmatprep.subr.bf16.mxu0 0
        %902 = vmatpush1.bf16.xpose.msra.mxu0 0
        %903 = vmatprep.subr.bf16.mxu0 0
        %904 = vmatpush1.bf16.xpose.msra.mxu0 0
        %905 = vmatprep.mubr.bf16.mxu0 0
        %906 = vmatmul.mubr.bf16.gmra.mrb[0].mxu0 %v868
        %v907 = vpop.f32.mrb[0].mxu0
        %v908 = vadd.f32 %v861, %v907
        %v909 = vpop.f32.mrb[0].mxu0
        %v910 = vpop.f32.mrb[0].mxu0
        %v911 = vpop.f32.mrb[0].mxu0
        %912 = vdwg.mxu0
        %v913 = vsel %vm866, %v908, -inf
        %914 = vmax.xlane.f32.xlu0 %v913
        %v915 = vpop.xlane.xlu0 %914
        %v916 = vsub.f32 %v908, %v915
        %v917 = vmul.f32 %v916, 1.442695
        %v918 = vpow.pop %v917
        %v919 = vsel %vm866, %v918, 0.0
        %920 = vadd.xlane.f32.xlu0 %v919
        %v921 = vpop.xlane.xlu0 %920
        %v922 = vrcp.pop %v921
        %v923 = vmul.f32 %v918, %v922
        %v924 = vpack.c.bf16 %v923, %v923
        %925 = vrot.lane.b32.xlu0 %v856, 64
        %v926 = vpop.permute.xlu0 %925
        %v928 = vsel %vm866, %v924, 0
        %vm930 = vcmask 1043456
        %v932 = vsel %vm930, %v926, 0
        %934 = vmatprep.subr.bf16.mxu0 0
        %935 = vmatpush1.bf16.msra.mxu0 %v932
        %936 = vmatprep.subr.bf16.mxu0 0
        %937 = vmatpush1.bf16.msra.mxu0 0
        %938 = vmatprep.subr.bf16.mxu0 0
        %939 = vmatpush1.bf16.msra.mxu0 0
        %940 = vmatprep.subr.bf16.mxu0 0
        %941 = vmatpush1.bf16.msra.mxu0 0
        %942 = vmatprep.subr.bf16.mxu0 0
        %943 = vmatpush1.bf16.msra.mxu0 0
        %944 = vmatprep.subr.bf16.mxu0 0
        %945 = vmatpush1.bf16.msra.mxu0 0
        %946 = vmatprep.subr.bf16.mxu0 0
        %947 = vmatpush1.bf16.msra.mxu0 0
        %948 = vmatprep.subr.bf16.mxu0 0
        %949 = vmatpush1.bf16.msra.mxu0 0
        %950 = vmatprep.subr.bf16.mxu0 0
        %951 = vmatpush1.bf16.msra.mxu0 0
        %952 = vmatprep.subr.bf16.mxu0 0
        %953 = vmatpush1.bf16.msra.mxu0 0
        %954 = vmatprep.subr.bf16.mxu0 0
        %955 = vmatpush1.bf16.msra.mxu0 0
        %956 = vmatprep.subr.bf16.mxu0 0
        %957 = vmatpush1.bf16.msra.mxu0 0
        %958 = vmatprep.subr.bf16.mxu0 0
        %959 = vmatpush1.bf16.msra.mxu0 0
        %960 = vmatprep.subr.bf16.mxu0 0
        %961 = vmatpush1.bf16.msra.mxu0 0
        %962 = vmatprep.subr.bf16.mxu0 0
        %963 = vmatpush1.bf16.msra.mxu0 0
        %964 = vmatprep.subr.bf16.mxu0 0
        %965 = vmatpush1.bf16.msra.mxu0 0
        %966 = vmatprep.mubr.bf16.mxu0 0
        %967 = vmatmul.mubr.bf16.gmra.mrb[0].mxu0 %v928
        %v968 = vpop.f32.mrb[0].mxu0
        %v969 = vadd.f32 0.0, %v968
        %v970 = vpop.f32.mrb[0].mxu0
        %v971 = vpop.f32.mrb[0].mxu0
        %v972 = vpop.f32.mrb[0].mxu0
        %973 = vdwg.mxu0
        %974 = vrot.lane.b32.xlu0 %v856, 120
        %v975 = vpop.permute.xlu0 %974
        %976 = vrot.lane.b32.xlu0 %v856, 88
        %v977 = vpop.permute.xlu0 %976
        %v979 = vsel %vm866, %v975, 0
        %v982 = vsel %vm866, %v977, 0
        %984 = vmatprep.subr.bf16.mxu0 0
        %985 = vmatpush1.bf16.xpose.msra.mxu0 %v982
        %986 = vmatprep.subr.bf16.mxu0 0
        %987 = vmatpush1.bf16.xpose.msra.mxu0 0
        %988 = vmatprep.subr.bf16.mxu0 0
        %989 = vmatpush1.bf16.xpose.msra.mxu0 0
        %990 = vmatprep.subr.bf16.mxu0 0
        %991 = vmatpush1.bf16.xpose.msra.mxu0 0
        %992 = vmatprep.subr.bf16.mxu0 0
        %993 = vmatpush1.bf16.xpose.msra.mxu0 0
        %994 = vmatprep.subr.bf16.mxu0 0
        %995 = vmatpush1.bf16.xpose.msra.mxu0 0
        %996 = vmatprep.subr.bf16.mxu0 0
        %997 = vmatpush1.bf16.xpose.msra.mxu0 0
        %998 = vmatprep.subr.bf16.mxu0 0
        %999 = vmatpush1.bf16.xpose.msra.mxu0 0
        %1000 = vmatprep.subr.bf16.mxu0 0
        %1001 = vmatpush1.bf16.xpose.msra.mxu0 0
        %1002 = vmatprep.subr.bf16.mxu0 0
        %1003 = vmatpush1.bf16.xpose.msra.mxu0 0
        %1004 = vmatprep.subr.bf16.mxu0 0
        %1005 = vmatpush1.bf16.xpose.msra.mxu0 0
        %1006 = vmatprep.subr.bf16.mxu0 0
        %1007 = vmatpush1.bf16.xpose.msra.mxu0 0
        %1008 = vmatprep.subr.bf16.mxu0 0
        %1009 = vmatpush1.bf16.xpose.msra.mxu0 0
        %1010 = vmatprep.subr.bf16.mxu0 0
        %1011 = vmatpush1.bf16.xpose.msra.mxu0 0
        %1012 = vmatprep.subr.bf16.mxu0 0
        %1013 = vmatpush1.bf16.xpose.msra.mxu0 0
        %1014 = vmatprep.subr.bf16.mxu0 0
        %1015 = vmatpush1.bf16.xpose.msra.mxu0 0
        %1016 = vmatprep.mubr.bf16.mxu0 0
        %1017 = vmatmul.mubr.bf16.gmra.mrb[0].mxu0 %v979
        %v1018 = vpop.f32.mrb[0].mxu0
        %v1019 = vadd.f32 %v861, %v1018
        %v1020 = vpop.f32.mrb[0].mxu0
        %v1021 = vpop.f32.mrb[0].mxu0
        %v1022 = vpop.f32.mrb[0].mxu0
        %1023 = vdwg.mxu0
        %v1024 = vsel %vm866, %v1019, -inf
        %1025 = vmax.xlane.f32.xlu0 %v1024
        %v1026 = vpop.xlane.xlu0 %1025
        %v1027 = vsub.f32 %v1019, %v1026
        %v1028 = vmul.f32 %v1027, 1.442695
        %v1029 = vpow.pop %v1028
        %v1030 = vsel %vm866, %v1029, 0.0
        %1031 = vadd.xlane.f32.xlu0 %v1030
        %v1032 = vpop.xlane.xlu0 %1031
        %v1033 = vrcp.pop %v1032
        %v1034 = vmul.f32 %v1029, %v1033
        %v1035 = vpack.c.bf16 %v1034, %v1034
        %1036 = vrot.lane.b32.xlu0 %v856, 56
        %v1037 = vpop.permute.xlu0 %1036
        %v1039 = vsel %vm866, %v1035, 0
        %v1042 = vsel %vm930, %v1037, 0
        %1044 = vmatprep.subr.bf16.mxu0 0
        %1045 = vmatpush1.bf16.msra.mxu0 %v1042
        %1046 = vmatprep.subr.bf16.mxu0 0
        %1047 = vmatpush1.bf16.msra.mxu0 0
        %1048 = vmatprep.subr.bf16.mxu0 0
        %1049 = vmatpush1.bf16.msra.mxu0 0
        %1050 = vmatprep.subr.bf16.mxu0 0
        %1051 = vmatpush1.bf16.msra.mxu0 0
        %1052 = vmatprep.subr.bf16.mxu0 0
        %1053 = vmatpush1.bf16.msra.mxu0 0
        %1054 = vmatprep.subr.bf16.mxu0 0
        %1055 = vmatpush1.bf16.msra.mxu0 0
        %1056 = vmatprep.subr.bf16.mxu0 0
        %1057 = vmatpush1.bf16.msra.mxu0 0
        %1058 = vmatprep.subr.bf16.mxu0 0
        %1059 = vmatpush1.bf16.msra.mxu0 0
        %1060 = vmatprep.subr.bf16.mxu0 0
        %1061 = vmatpush1.bf16.msra.mxu0 0
        %1062 = vmatprep.subr.bf16.mxu0 0
        %1063 = vmatpush1.bf16.msra.mxu0 0
        %1064 = vmatprep.subr.bf16.mxu0 0
        %1065 = vmatpush1.bf16.msra.mxu0 0
        %1066 = vmatprep.subr.bf16.mxu0 0
        %1067 = vmatpush1.bf16.msra.mxu0 0
        %1068 = vmatprep.subr.bf16.mxu0 0
        %1069 = vmatpush1.bf16.msra.mxu0 0
        %1070 = vmatprep.subr.bf16.mxu0 0
        %1071 = vmatpush1.bf16.msra.mxu0 0
        %1072 = vmatprep.subr.bf16.mxu0 0
        %1073 = vmatpush1.bf16.msra.mxu0 0
        %1074 = vmatprep.subr.bf16.mxu0 0
        %1075 = vmatpush1.bf16.msra.mxu0 0
        %1076 = vmatprep.mubr.bf16.mxu0 0
        %1077 = vmatmul.mubr.bf16.gmra.mrb[0].mxu0 %v1039
        %v1078 = vpop.f32.mrb[0].mxu0
        %v1079 = vadd.f32 0.0, %v1078
        %v1080 = vpop.f32.mrb[0].mxu0
        %v1081 = vpop.f32.mrb[0].mxu0
        %v1082 = vpop.f32.mrb[0].mxu0
        %1083 = vdwg.mxu0
        %1084 = vrot.lane.b32.xlu0 %v856, 112
        %v1085 = vpop.permute.xlu0 %1084
        %1086 = vrot.lane.b32.xlu0 %v856, 80
        %v1087 = vpop.permute.xlu0 %1086
        %v1089 = vsel %vm866, %v1085, 0
        %v1092 = vsel %vm866, %v1087, 0
        %1094 = vmatprep.subr.bf16.mxu0 0
        %1095 = vmatpush1.bf16.xpose.msra.mxu0 %v1092
        %1096 = vmatprep.subr.bf16.mxu0 0
        %1097 = vmatpush1.bf16.xpose.msra.mxu0 0
        %1098 = vmatprep.subr.bf16.mxu0 0
        %1099 = vmatpush1.bf16.xpose.msra.mxu0 0
        %1100 = vmatprep.subr.bf16.mxu0 0
        %1101 = vmatpush1.bf16.xpose.msra.mxu0 0
        %1102 = vmatprep.subr.bf16.mxu0 0
        %1103 = vmatpush1.bf16.xpose.msra.mxu0 0
        %1104 = vmatprep.subr.bf16.mxu0 0
        %1105 = vmatpush1.bf16.xpose.msra.mxu0 0
        %1106 = vmatprep.subr.bf16.mxu0 0
        %1107 = vmatpush1.bf16.xpose.msra.mxu0 0
        %1108 = vmatprep.subr.bf16.mxu0 0
        %1109 = vmatpush1.bf16.xpose.msra.mxu0 0
        %1110 = vmatprep.subr.bf16.mxu0 0
        %1111 = vmatpush1.bf16.xpose.msra.mxu0 0
        %1112 = vmatprep.subr.bf16.mxu0 0
        %1113 = vmatpush1.bf16.xpose.msra.mxu0 0
        %1114 = vmatprep.subr.bf16.mxu0 0
        %1115 = vmatpush1.bf16.xpose.msra.mxu0 0
        %1116 = vmatprep.subr.bf16.mxu0 0
        %1117 = vmatpush1.bf16.xpose.msra.mxu0 0
        %1118 = vmatprep.subr.bf16.mxu0 0
        %1119 = vmatpush1.bf16.xpose.msra.mxu0 0
        %1120 = vmatprep.subr.bf16.mxu0 0
        %1121 = vmatpush1.bf16.xpose.msra.mxu0 0
        %1122 = vmatprep.subr.bf16.mxu0 0
        %1123 = vmatpush1.bf16.xpose.msra.mxu0 0
        %1124 = vmatprep.subr.bf16.mxu0 0
        %1125 = vmatpush1.bf16.xpose.msra.mxu0 0
        %1126 = vmatprep.mubr.bf16.mxu0 0
        %1127 = vmatmul.mubr.bf16.gmra.mrb[0].mxu0 %v1089
        %v1128 = vpop.f32.mrb[0].mxu0
        %v1129 = vadd.f32 %v861, %v1128
        %v1130 = vpop.f32.mrb[0].mxu0
        %v1131 = vpop.f32.mrb[0].mxu0
        %v1132 = vpop.f32.mrb[0].mxu0
        %1133 = vdwg.mxu0
        %v1134 = vsel %vm866, %v1129, -inf
        %1135 = vmax.xlane.f32.xlu0 %v1134
        %v1136 = vpop.xlane.xlu0 %1135
        %v1137 = vsub.f32 %v1129, %v1136
        %v1138 = vmul.f32 %v1137, 1.442695
        %v1139 = vpow.pop %v1138
        %v1140 = vsel %vm866, %v1139, 0.0
        %1141 = vadd.xlane.f32.xlu0 %v1140
        %v1142 = vpop.xlane.xlu0 %1141
        %v1143 = vrcp.pop %v1142
        %v1144 = vmul.f32 %v1139, %v1143
        %v1145 = vpack.c.bf16 %v1144, %v1144
        %1146 = vrot.lane.b32.xlu0 %v856, 48
        %v1147 = vpop.permute.xlu0 %1146
        %v1149 = vsel %vm866, %v1145, 0
        %v1152 = vsel %vm930, %v1147, 0
        %1154 = vmatprep.subr.bf16.mxu0 0
        %1155 = vmatpush1.bf16.msra.mxu0 %v1152
        %1156 = vmatprep.subr.bf16.mxu0 0
        %1157 = vmatpush1.bf16.msra.mxu0 0
        %1158 = vmatprep.subr.bf16.mxu0 0
        %1159 = vmatpush1.bf16.msra.mxu0 0
        %1160 = vmatprep.subr.bf16.mxu0 0
        %1161 = vmatpush1.bf16.msra.mxu0 0
        %1162 = vmatprep.subr.bf16.mxu0 0
        %1163 = vmatpush1.bf16.msra.mxu0 0
        %1164 = vmatprep.subr.bf16.mxu0 0
        %1165 = vmatpush1.bf16.msra.mxu0 0
        %1166 = vmatprep.subr.bf16.mxu0 0
        %1167 = vmatpush1.bf16.msra.mxu0 0
        %1168 = vmatprep.subr.bf16.mxu0 0
        %1169 = vmatpush1.bf16.msra.mxu0 0
        %1170 = vmatprep.subr.bf16.mxu0 0
        %1171 = vmatpush1.bf16.msra.mxu0 0
        %1172 = vmatprep.subr.bf16.mxu0 0
        %1173 = vmatpush1.bf16.msra.mxu0 0
        %1174 = vmatprep.subr.bf16.mxu0 0
        %1175 = vmatpush1.bf16.msra.mxu0 0
        %1176 = vmatprep.subr.bf16.mxu0 0
        %1177 = vmatpush1.bf16.msra.mxu0 0
        %1178 = vmatprep.subr.bf16.mxu0 0
        %1179 = vmatpush1.bf16.msra.mxu0 0
        %1180 = vmatprep.subr.bf16.mxu0 0
        %1181 = vmatpush1.bf16.msra.mxu0 0
        %1182 = vmatprep.subr.bf16.mxu0 0
        %1183 = vmatpush1.bf16.msra.mxu0 0
        %1184 = vmatprep.subr.bf16.mxu0 0
        %1185 = vmatpush1.bf16.msra.mxu0 0
        %1186 = vmatprep.mubr.bf16.mxu0 0
        %1187 = vmatmul.mubr.bf16.gmra.mrb[0].mxu0 %v1149
        %v1188 = vpop.f32.mrb[0].mxu0
        %v1189 = vadd.f32 0.0, %v1188
        %v1190 = vpop.f32.mrb[0].mxu0
        %v1191 = vpop.f32.mrb[0].mxu0
        %v1192 = vpop.f32.mrb[0].mxu0
        %1193 = vdwg.mxu0
        %1194 = vrot.lane.b32.xlu0 %v856, 104
        %v1195 = vpop.permute.xlu0 %1194
        %1196 = vrot.lane.b32.xlu0 %v856, 72
        %v1197 = vpop.permute.xlu0 %1196
        %v1199 = vsel %vm866, %v1195, 0
        %v1202 = vsel %vm866, %v1197, 0
        %1204 = vmatprep.subr.bf16.mxu0 0
        %1205 = vmatpush1.bf16.xpose.msra.mxu0 %v1202
        %1206 = vmatprep.subr.bf16.mxu0 0
        %1207 = vmatpush1.bf16.xpose.msra.mxu0 0
        %1208 = vmatprep.subr.bf16.mxu0 0
        %1209 = vmatpush1.bf16.xpose.msra.mxu0 0
        %1210 = vmatprep.subr.bf16.mxu0 0
        %1211 = vmatpush1.bf16.xpose.msra.mxu0 0
        %1212 = vmatprep.subr.bf16.mxu0 0
        %1213 = vmatpush1.bf16.xpose.msra.mxu0 0
        %1214 = vmatprep.subr.bf16.mxu0 0
        %1215 = vmatpush1.bf16.xpose.msra.mxu0 0
        %1216 = vmatprep.subr.bf16.mxu0 0
        %1217 = vmatpush1.bf16.xpose.msra.mxu0 0
        %1218 = vmatprep.subr.bf16.mxu0 0
        %1219 = vmatpush1.bf16.xpose.msra.mxu0 0
        %1220 = vmatprep.subr.bf16.mxu0 0
        %1221 = vmatpush1.bf16.xpose.msra.mxu0 0
        %1222 = vmatprep.subr.bf16.mxu0 0
        %1223 = vmatpush1.bf16.xpose.msra.mxu0 0
        %1224 = vmatprep.subr.bf16.mxu0 0
        %1225 = vmatpush1.bf16.xpose.msra.mxu0 0
        %1226 = vmatprep.subr.bf16.mxu0 0
        %1227 = vmatpush1.bf16.xpose.msra.mxu0 0
        %1228 = vmatprep.subr.bf16.mxu0 0
        %1229 = vmatpush1.bf16.xpose.msra.mxu0 0
        %1230 = vmatprep.subr.bf16.mxu0 0
        %1231 = vmatpush1.bf16.xpose.msra.mxu0 0
        %1232 = vmatprep.subr.bf16.mxu0 0
        %1233 = vmatpush1.bf16.xpose.msra.mxu0 0
        %1234 = vmatprep.subr.bf16.mxu0 0
        %1235 = vmatpush1.bf16.xpose.msra.mxu0 0
        %1236 = vmatprep.mubr.bf16.mxu0 0
        %1237 = vmatmul.mubr.bf16.gmra.mrb[0].mxu0 %v1199
        %v1238 = vpop.f32.mrb[0].mxu0
        %v1239 = vadd.f32 %v861, %v1238
        %v1240 = vpop.f32.mrb[0].mxu0
        %v1241 = vpop.f32.mrb[0].mxu0
        %v1242 = vpop.f32.mrb[0].mxu0
        %1243 = vdwg.mxu0
        %v1244 = vsel %vm866, %v1239, -inf
        %1245 = vmax.xlane.f32.xlu0 %v1244
        %v1246 = vpop.xlane.xlu0 %1245
        %v1247 = vsub.f32 %v1239, %v1246
        %v1248 = vmul.f32 %v1247, 1.442695
        %v1249 = vpow.pop %v1248
        %v1250 = vsel %vm866, %v1249, 0.0
        %1251 = vadd.xlane.f32.xlu0 %v1250
        %v1252 = vpop.xlane.xlu0 %1251
        %v1253 = vrcp.pop %v1252
        %v1254 = vmul.f32 %v1249, %v1253
        %v1255 = vpack.c.bf16 %v1254, %v1254
        %1256 = vrot.lane.b32.xlu0 %v856, 40
        %v1257 = vpop.permute.xlu0 %1256
        %v1259 = vsel %vm866, %v1255, 0
        %v1262 = vsel %vm930, %v1257, 0
        %1264 = vmatprep.subr.bf16.mxu0 0
        %1265 = vmatpush1.bf16.msra.mxu0 %v1262
        %1266 = vmatprep.subr.bf16.mxu0 0
        %1267 = vmatpush1.bf16.msra.mxu0 0
        %1268 = vmatprep.subr.bf16.mxu0 0
        %1269 = vmatpush1.bf16.msra.mxu0 0
        %1270 = vmatprep.subr.bf16.mxu0 0
        %1271 = vmatpush1.bf16.msra.mxu0 0
        %1272 = vmatprep.subr.bf16.mxu0 0
        %1273 = vmatpush1.bf16.msra.mxu0 0
        %1274 = vmatprep.subr.bf16.mxu0 0
        %1275 = vmatpush1.bf16.msra.mxu0 0
        %1276 = vmatprep.subr.bf16.mxu0 0
        %1277 = vmatpush1.bf16.msra.mxu0 0
        %1278 = vmatprep.subr.bf16.mxu0 0
        %1279 = vmatpush1.bf16.msra.mxu0 0
        %1280 = vmatprep.subr.bf16.mxu0 0
        %1281 = vmatpush1.bf16.msra.mxu0 0
        %1282 = vmatprep.subr.bf16.mxu0 0
        %1283 = vmatpush1.bf16.msra.mxu0 0
        %1284 = vmatprep.subr.bf16.mxu0 0
        %1285 = vmatpush1.bf16.msra.mxu0 0
        %1286 = vmatprep.subr.bf16.mxu0 0
        %1287 = vmatpush1.bf16.msra.mxu0 0
        %1288 = vmatprep.subr.bf16.mxu0 0
        %1289 = vmatpush1.bf16.msra.mxu0 0
        %1290 = vmatprep.subr.bf16.mxu0 0
        %1291 = vmatpush1.bf16.msra.mxu0 0
        %1292 = vmatprep.subr.bf16.mxu0 0
        %1293 = vmatpush1.bf16.msra.mxu0 0
        %1294 = vmatprep.subr.bf16.mxu0 0
        %1295 = vmatpush1.bf16.msra.mxu0 0
        %1296 = vmatprep.mubr.bf16.mxu0 0
        %1297 = vmatmul.mubr.bf16.gmra.mrb[0].mxu0 %v1259
        %v1298 = vpop.f32.mrb[0].mxu0
        %v1299 = vadd.f32 0.0, %v1298
        %v1300 = vpop.f32.mrb[0].mxu0
        %v1301 = vpop.f32.mrb[0].mxu0
        %v1302 = vpop.f32.mrb[0].mxu0
        %1303 = vdwg.mxu0
        %1305 = vrot.lane.b32.xlu0 %v1079, 8
        %v1306 = vpop.permute.xlu0 %1305
        %1309 = vrot.lane.b32.xlu0 %v1189, 16
        %v1310 = vpop.permute.xlu0 %1309
        %1313 = vrot.lane.b32.xlu0 %v1299, 24
        %v1314 = vpop.permute.xlu0 %1313
        %v1316 = vsel %vm866, %v969, %v1306
        %vm1317 = vcmask 130048
        %v1318 = vsel %vm1317, %v1316, %v1310
        %vm1319 = vcmask 195584
        %v1320 = vsel %vm1319, %v1318, %v1314
        %v1321 = vpack.c.bf16 %v1320, %v1320
        %v1323 = vlaneseq
        %v1324 = vshrl.u32 %v1323, 7
        %v1325 = vsub.s32 0, %v1324
        %v1326 = vrot.slane %v763, %v1325
        %v1332 = vunpack.c.l.b16 %v759
        %v1333 = vunpack.c.l.b16 %v760
        %v1334 = vunpack.c.l.b16 %v761
        %v1335 = vunpack.c.l.b16 %v762
        %v1336 = vpack.c.b16 %v1333, %v1332
        %v1337 = vpack.c.b16 %v1335, %v1334
        %v1341 = vsel %vm812, %v1321, 0
        %1343 = vmatprep.subr.bf16.mxu0 0
        %1344 = vmatpush1.bf16.msra.mxu0 %v1336
        %1345 = vmatprep.subr.bf16.mxu0 0
        %1346 = vmatpush1.bf16.msra.mxu0 %v1337
        %1347 = vmatprep.subr.bf16.mxu0 0
        %1348 = vmatpush1.bf16.msra.mxu0 0
        %1349 = vmatprep.subr.bf16.mxu0 0
        %1350 = vmatpush1.bf16.msra.mxu0 0
        %1351 = vmatprep.subr.bf16.mxu0 0
        %1352 = vmatpush1.bf16.msra.mxu0 0
        %1353 = vmatprep.subr.bf16.mxu0 0
        %1354 = vmatpush1.bf16.msra.mxu0 0
        %1355 = vmatprep.subr.bf16.mxu0 0
        %1356 = vmatpush1.bf16.msra.mxu0 0
        %1357 = vmatprep.subr.bf16.mxu0 0
        %1358 = vmatpush1.bf16.msra.mxu0 0
        %1359 = vmatprep.subr.bf16.mxu0 0
        %1360 = vmatpush1.bf16.msra.mxu0 0
        %1361 = vmatprep.subr.bf16.mxu0 0
        %1362 = vmatpush1.bf16.msra.mxu0 0
        %1363 = vmatprep.subr.bf16.mxu0 0
        %1364 = vmatpush1.bf16.msra.mxu0 0
        %1365 = vmatprep.subr.bf16.mxu0 0
        %1366 = vmatpush1.bf16.msra.mxu0 0
        %1367 = vmatprep.subr.bf16.mxu0 0
        %1368 = vmatpush1.bf16.msra.mxu0 0
        %1369 = vmatprep.subr.bf16.mxu0 0
        %1370 = vmatpush1.bf16.msra.mxu0 0
        %1371 = vmatprep.subr.bf16.mxu0 0
        %1372 = vmatpush1.bf16.msra.mxu0 0
        %1373 = vmatprep.subr.bf16.mxu0 0
        %1374 = vmatpush1.bf16.msra.mxu0 0
        %1375 = vmatprep.mubr.bf16.mxu0 0
        %1376 = vmatmul.mubr.bf16.gmra.mrb[0].mxu0 %v1341
        %v1377 = vpop.f32.mrb[0].mxu0
        %v1378 = vadd.f32 %v1326, %v1377
        %v1379 = vpop.f32.mrb[0].mxu0
        %v1380 = vpop.f32.mrb[0].mxu0
        %v1381 = vpop.f32.mrb[0].mxu0
        %1382 = vdwg.mxu0
        %v1384 = vsel %vm866, %v790, 0
        %1386 = vmatprep.subr.mxu0 0.0
        %1387 = vmatpush1.msra.mxu0 %v1378
        %1388 = vmatprep.subr.mxu0 0.0
        %1389 = vmatpush1.msra.mxu0 0.0
        %1390 = vmatprep.subr.mxu0 0.0
        %1391 = vmatpush1.msra.mxu0 0.0
        %1392 = vmatprep.subr.mxu0 0.0
        %1393 = vmatpush1.msra.mxu0 0.0
        %1394 = vmatprep.subr.mxu0 0.0
        %1395 = vmatpush1.msra.mxu0 0.0
        %1396 = vmatprep.subr.mxu0 0.0
        %1397 = vmatpush1.msra.mxu0 0.0
        %1398 = vmatprep.subr.mxu0 0.0
        %1399 = vmatpush1.msra.mxu0 0.0
        %1400 = vmatprep.subr.mxu0 0.0
        %1401 = vmatpush1.msra.mxu0 0.0
        %1402 = vmatprep.subr.mxu0 0.0
        %1403 = vmatpush1.msra.mxu0 0.0
        %1404 = vmatprep.subr.mxu0 0.0
        %1405 = vmatpush1.msra.mxu0 0.0
        %1406 = vmatprep.subr.mxu0 0.0
        %1407 = vmatpush1.msra.mxu0 0.0
        %1408 = vmatprep.subr.mxu0 0.0
        %1409 = vmatpush1.msra.mxu0 0.0
        %1410 = vmatprep.subr.mxu0 0.0
        %1411 = vmatpush1.msra.mxu0 0.0
        %1412 = vmatprep.subr.mxu0 0.0
        %1413 = vmatpush1.msra.mxu0 0.0
        %1414 = vmatprep.subr.mxu0 0.0
        %1415 = vmatpush1.msra.mxu0 0.0
        %1416 = vmatprep.subr.mxu0 0.0
        %1417 = vmatpush1.msra.mxu0 0.0
        %1418 = vmatprep.subr.mxu0 0.0
        %1419 = vmatpush1.msra.mxu0 0.0
        %1420 = vmatprep.subr.mxu0 0.0
        %1421 = vmatpush1.msra.mxu0 0.0
        %1422 = vmatprep.subr.mxu0 0.0
        %1423 = vmatpush1.msra.mxu0 0.0
        %1424 = vmatprep.subr.mxu0 0.0
        %1425 = vmatpush1.msra.mxu0 0.0
        %1426 = vmatprep.subr.mxu0 0.0
        %1427 = vmatpush1.msra.mxu0 0.0
        %1428 = vmatprep.subr.mxu0 0.0
        %1429 = vmatpush1.msra.mxu0 0.0
        %1430 = vmatprep.subr.mxu0 0.0
        %1431 = vmatpush1.msra.mxu0 0.0
        %1432 = vmatprep.subr.mxu0 0.0
        %1433 = vmatpush1.msra.mxu0 0.0
        %1434 = vmatprep.subr.mxu0 0.0
        %1435 = vmatpush1.msra.mxu0 0.0
        %1436 = vmatprep.subr.mxu0 0.0
        %1437 = vmatpush1.msra.mxu0 0.0
        %1438 = vmatprep.subr.mxu0 0.0
        %1439 = vmatpush1.msra.mxu0 0.0
        %1440 = vmatprep.subr.mxu0 0.0
        %1441 = vmatpush1.msra.mxu0 0.0
        %1442 = vmatprep.subr.mxu0 0.0
        %1443 = vmatpush1.msra.mxu0 0.0
        %1444 = vmatprep.subr.mxu0 0.0
        %1445 = vmatpush1.msra.mxu0 0.0
        %1446 = vmatprep.subr.mxu0 0.0
        %1447 = vmatpush1.msra.mxu0 0.0
        %1448 = vmatprep.subr.mxu0 0.0
        %1449 = vmatpush1.msra.mxu0 0.0
        %1450 = vmatprep.mubr.f32.mxu0 0.0
        %1451 = vmatmul.mubr.f32.gmra.mrb[0].mxu0 %v1384
        %v1452 = vpop.f32.mrb[0].mxu0
        %v1453 = vadd.f32 0.0, %v1452
        %v1454 = vpop.f32.mrb[0].mxu0
        %1455 = vdwg.mxu0
        %vm1456 = vcmask 57344
        %v1457 = vsel %vm1456, %v790, 0.0
        %1458 = vadd.xlane.f32.xlu0 %v1457
        %v1459 = vpop.xlane.xlu0 %1458
        %v1460 = vrcp.pop %v1459
        %v1461 = vmul.f32 %v1453, %v1460
        %v1462 = vld [vmem:[%s595] sm:$0x7]
        %v1464 = vlaneseq
        %v1465 = vshrl.u32 %v1464, 7
        %v1466 = vsub.s32 0, %v1465
        %v1467 = vrot.slane %v770, %v1466
        %v1473 = vunpack.c.l.b16 %v765
        %v1474 = vunpack.c.l.b16 %v766
        %v1475 = vunpack.c.l.b16 %v767
        %v1476 = vunpack.c.l.b16 %v768
        %v1477 = vpack.c.b16 %v1474, %v1473
        %v1478 = vpack.c.b16 %v1476, %v1475
        %v1482 = vsel %vm812, %v1462, 0
        %1484 = vmatprep.subr.bf16.mxu0 0
        %1485 = vmatpush1.bf16.msra.mxu0 %v1477
        %1486 = vmatprep.subr.bf16.mxu0 0
        %1487 = vmatpush1.bf16.msra.mxu0 %v1478
        %1488 = vmatprep.subr.bf16.mxu0 0
        %1489 = vmatpush1.bf16.msra.mxu0 0
        %1490 = vmatprep.subr.bf16.mxu0 0
        %1491 = vmatpush1.bf16.msra.mxu0 0
        %1492 = vmatprep.subr.bf16.mxu0 0
        %1493 = vmatpush1.bf16.msra.mxu0 0
        %1494 = vmatprep.subr.bf16.mxu0 0
        %1495 = vmatpush1.bf16.msra.mxu0 0
        %1496 = vmatprep.subr.bf16.mxu0 0
        %1497 = vmatpush1.bf16.msra.mxu0 0
        %1498 = vmatprep.subr.bf16.mxu0 0
        %1499 = vmatpush1.bf16.msra.mxu0 0
        %1500 = vmatprep.subr.bf16.mxu0 0
        %1501 = vmatpush1.bf16.msra.mxu0 0
        %1502 = vmatprep.subr.bf16.mxu0 0
        %1503 = vmatpush1.bf16.msra.mxu0 0
        %1504 = vmatprep.subr.bf16.mxu0 0
        %1505 = vmatpush1.bf16.msra.mxu0 0
        %1506 = vmatprep.subr.bf16.mxu0 0
        %1507 = vmatpush1.bf16.msra.mxu0 0
        %1508 = vmatprep.subr.bf16.mxu0 0
        %1509 = vmatpush1.bf16.msra.mxu0 0
        %1510 = vmatprep.subr.bf16.mxu0 0
        %1511 = vmatpush1.bf16.msra.mxu0 0
        %1512 = vmatprep.subr.bf16.mxu0 0
        %1513 = vmatpush1.bf16.msra.mxu0 0
        %1514 = vmatprep.subr.bf16.mxu0 0
        %1515 = vmatpush1.bf16.msra.mxu0 0
        %1516 = vmatprep.mubr.bf16.mxu0 0
        %1517 = vmatmul.mubr.bf16.gmra.mrb[0].mxu0 %v1482
        %v1518 = vpop.f32.mrb[0].mxu0
        %v1519 = vadd.f32 %v1467, %v1518
        %v1520 = vpop.f32.mrb[0].mxu0
        %v1521 = vpop.f32.mrb[0].mxu0
        %v1522 = vpop.f32.mrb[0].mxu0
        %1523 = vdwg.mxu0
        %v1524 = vpack.c.bf16 %v1519, %v1519
        %1526 = vrot.lane.b32.xlu0 %v1524, 96
        %v1527 = vpop.permute.xlu0 %1526
        %v1529 = vsel %vm866, %v1524, 0
        %v1532 = vsel %vm866, %v1527, 0
        %1534 = vmatprep.subr.bf16.mxu0 0
        %1535 = vmatpush1.bf16.xpose.msra.mxu0 %v1532
        %1536 = vmatprep.subr.bf16.mxu0 0
        %1537 = vmatpush1.bf16.xpose.msra.mxu0 0
        %1538 = vmatprep.subr.bf16.mxu0 0
        %1539 = vmatpush1.bf16.xpose.msra.mxu0 0
        %1540 = vmatprep.subr.bf16.mxu0 0
        %1541 = vmatpush1.bf16.xpose.msra.mxu0 0
        %1542 = vmatprep.subr.bf16.mxu0 0
        %1543 = vmatpush1.bf16.xpose.msra.mxu0 0
        %1544 = vmatprep.subr.bf16.mxu0 0
        %1545 = vmatpush1.bf16.xpose.msra.mxu0 0
        %1546 = vmatprep.subr.bf16.mxu0 0
        %1547 = vmatpush1.bf16.xpose.msra.mxu0 0
        %1548 = vmatprep.subr.bf16.mxu0 0
        %1549 = vmatpush1.bf16.xpose.msra.mxu0 0
        %1550 = vmatprep.subr.bf16.mxu0 0
        %1551 = vmatpush1.bf16.xpose.msra.mxu0 0
        %1552 = vmatprep.subr.bf16.mxu0 0
        %1553 = vmatpush1.bf16.xpose.msra.mxu0 0
        %1554 = vmatprep.subr.bf16.mxu0 0
        %1555 = vmatpush1.bf16.xpose.msra.mxu0 0
        %1556 = vmatprep.subr.bf16.mxu0 0
        %1557 = vmatpush1.bf16.xpose.msra.mxu0 0
        %1558 = vmatprep.subr.bf16.mxu0 0
        %1559 = vmatpush1.bf16.xpose.msra.mxu0 0
        %1560 = vmatprep.subr.bf16.mxu0 0
        %1561 = vmatpush1.bf16.xpose.msra.mxu0 0
        %1562 = vmatprep.subr.bf16.mxu0 0
        %1563 = vmatpush1.bf16.xpose.msra.mxu0 0
        %1564 = vmatprep.subr.bf16.mxu0 0
        %1565 = vmatpush1.bf16.xpose.msra.mxu0 0
        %1566 = vmatprep.mubr.bf16.mxu0 0
        %1567 = vmatmul.mubr.bf16.gmra.mrb[0].mxu0 %v1529
        %v1568 = vpop.f32.mrb[0].mxu0
        %v1569 = vadd.f32 0.0, %v1568
        %v1570 = vpop.f32.mrb[0].mxu0
        %v1571 = vpop.f32.mrb[0].mxu0
        %v1572 = vpop.f32.mrb[0].mxu0
        %1573 = vdwg.mxu0
        %vm1574 = vcmask 46080
        %v1575 = vsel %vm1574, %v1569, -inf
        %1576 = vmax.xlane.f32.xlu0 %v1575
        %v1577 = vpop.xlane.xlu0 %1576
        %v1578 = vsub.f32 %v1569, %v1577
        %v1579 = vmul.f32 %v1578, 1.442695
        %v1580 = vpow.pop %v1579
        %v1581 = vsel %vm1574, %v1580, 0.0
        %1582 = vadd.xlane.f32.xlu0 %v1581
        %v1583 = vpop.xlane.xlu0 %1582
        %v1584 = vrcp.pop %v1583
        %v1585 = vmul.f32 %v1580, %v1584
        %v1586 = vpack.c.bf16 %v1585, %v1585
        %1587 = vrot.lane.b32.xlu0 %v1524, 64
        %v1588 = vpop.permute.xlu0 %1587
        %vm1589 = vcmask 48128
        %v1591 = vsel %vm1589, %v1586, 0
        %vm1593 = vcmask 1042432
        %v1595 = vsel %vm1593, %v1588, 0
        %1597 = vmatprep.subr.bf16.mxu0 0
        %1598 = vmatpush1.bf16.msra.mxu0 %v1595
        %1599 = vmatprep.subr.bf16.mxu0 0
        %1600 = vmatpush1.bf16.msra.mxu0 0
        %1601 = vmatprep.subr.bf16.mxu0 0
        %1602 = vmatpush1.bf16.msra.mxu0 0
        %1603 = vmatprep.subr.bf16.mxu0 0
        %1604 = vmatpush1.bf16.msra.mxu0 0
        %1605 = vmatprep.subr.bf16.mxu0 0
        %1606 = vmatpush1.bf16.msra.mxu0 0
        %1607 = vmatprep.subr.bf16.mxu0 0
        %1608 = vmatpush1.bf16.msra.mxu0 0
        %1609 = vmatprep.subr.bf16.mxu0 0
        %1610 = vmatpush1.bf16.msra.mxu0 0
        %1611 = vmatprep.subr.bf16.mxu0 0
        %1612 = vmatpush1.bf16.msra.mxu0 0
        %1613 = vmatprep.subr.bf16.mxu0 0
        %1614 = vmatpush1.bf16.msra.mxu0 0
        %1615 = vmatprep.subr.bf16.mxu0 0
        %1616 = vmatpush1.bf16.msra.mxu0 0
        %1617 = vmatprep.subr.bf16.mxu0 0
        %1618 = vmatpush1.bf16.msra.mxu0 0
        %1619 = vmatprep.subr.bf16.mxu0 0
        %1620 = vmatpush1.bf16.msra.mxu0 0
        %1621 = vmatprep.subr.bf16.mxu0 0
        %1622 = vmatpush1.bf16.msra.mxu0 0
        %1623 = vmatprep.subr.bf16.mxu0 0
        %1624 = vmatpush1.bf16.msra.mxu0 0
        %1625 = vmatprep.subr.bf16.mxu0 0
        %1626 = vmatpush1.bf16.msra.mxu0 0
        %1627 = vmatprep.subr.bf16.mxu0 0
        %1628 = vmatpush1.bf16.msra.mxu0 0
        %1629 = vmatprep.mubr.bf16.mxu0 0
        %1630 = vmatmul.mubr.bf16.gmra.mrb[0].mxu0 %v1591
        %v1631 = vpop.f32.mrb[0].mxu0
        %v1632 = vadd.f32 0.0, %v1631
        %v1633 = vpop.f32.mrb[0].mxu0
        %v1634 = vpop.f32.mrb[0].mxu0
        %v1635 = vpop.f32.mrb[0].mxu0
        %1636 = vdwg.mxu0
        %1637 = vrot.lane.b32.xlu0 %v1524, 120
        %v1638 = vpop.permute.xlu0 %1637
        %1639 = vrot.lane.b32.xlu0 %v1524, 88
        %v1640 = vpop.permute.xlu0 %1639
        %v1642 = vsel %vm866, %v1638, 0
        %v1645 = vsel %vm866, %v1640, 0
        %1647 = vmatprep.subr.bf16.mxu0 0
        %1648 = vmatpush1.bf16.xpose.msra.mxu0 %v1645
        %1649 = vmatprep.subr.bf16.mxu0 0
        %1650 = vmatpush1.bf16.xpose.msra.mxu0 0
        %1651 = vmatprep.subr.bf16.mxu0 0
        %1652 = vmatpush1.bf16.xpose.msra.mxu0 0
        %1653 = vmatprep.subr.bf16.mxu0 0
        %1654 = vmatpush1.bf16.xpose.msra.mxu0 0
        %1655 = vmatprep.subr.bf16.mxu0 0
        %1656 = vmatpush1.bf16.xpose.msra.mxu0 0
        %1657 = vmatprep.subr.bf16.mxu0 0
        %1658 = vmatpush1.bf16.xpose.msra.mxu0 0
        %1659 = vmatprep.subr.bf16.mxu0 0
        %1660 = vmatpush1.bf16.xpose.msra.mxu0 0
        %1661 = vmatprep.subr.bf16.mxu0 0
        %1662 = vmatpush1.bf16.xpose.msra.mxu0 0
        %1663 = vmatprep.subr.bf16.mxu0 0
        %1664 = vmatpush1.bf16.xpose.msra.mxu0 0
        %1665 = vmatprep.subr.bf16.mxu0 0
        %1666 = vmatpush1.bf16.xpose.msra.mxu0 0
        %1667 = vmatprep.subr.bf16.mxu0 0
        %1668 = vmatpush1.bf16.xpose.msra.mxu0 0
        %1669 = vmatprep.subr.bf16.mxu0 0
        %1670 = vmatpush1.bf16.xpose.msra.mxu0 0
        %1671 = vmatprep.subr.bf16.mxu0 0
        %1672 = vmatpush1.bf16.xpose.msra.mxu0 0
        %1673 = vmatprep.subr.bf16.mxu0 0
        %1674 = vmatpush1.bf16.xpose.msra.mxu0 0
        %1675 = vmatprep.subr.bf16.mxu0 0
        %1676 = vmatpush1.bf16.xpose.msra.mxu0 0
        %1677 = vmatprep.subr.bf16.mxu0 0
        %1678 = vmatpush1.bf16.xpose.msra.mxu0 0
        %1679 = vmatprep.mubr.bf16.mxu0 0
        %1680 = vmatmul.mubr.bf16.gmra.mrb[0].mxu0 %v1642
        %v1681 = vpop.f32.mrb[0].mxu0
        %v1682 = vadd.f32 0.0, %v1681
        %v1683 = vpop.f32.mrb[0].mxu0
        %v1684 = vpop.f32.mrb[0].mxu0
        %v1685 = vpop.f32.mrb[0].mxu0
        %1686 = vdwg.mxu0
        %v1687 = vsel %vm1574, %v1682, -inf
        %1688 = vmax.xlane.f32.xlu0 %v1687
        %v1689 = vpop.xlane.xlu0 %1688
        %v1690 = vsub.f32 %v1682, %v1689
        %v1691 = vmul.f32 %v1690, 1.442695
        %v1692 = vpow.pop %v1691
        %v1693 = vsel %vm1574, %v1692, 0.0
        %1694 = vadd.xlane.f32.xlu0 %v1693
        %v1695 = vpop.xlane.xlu0 %1694
        %v1696 = vrcp.pop %v1695
        %v1697 = vmul.f32 %v1692, %v1696
        %v1698 = vpack.c.bf16 %v1697, %v1697
        %1699 = vrot.lane.b32.xlu0 %v1524, 56
        %v1700 = vpop.permute.xlu0 %1699
        %v1702 = vsel %vm1589, %v1698, 0
        %v1705 = vsel %vm1593, %v1700, 0
        %1707 = vmatprep.subr.bf16.mxu0 0
        %1708 = vmatpush1.bf16.msra.mxu0 %v1705
        %1709 = vmatprep.subr.bf16.mxu0 0
        %1710 = vmatpush1.bf16.msra.mxu0 0
        %1711 = vmatprep.subr.bf16.mxu0 0
        %1712 = vmatpush1.bf16.msra.mxu0 0
        %1713 = vmatprep.subr.bf16.mxu0 0
        %1714 = vmatpush1.bf16.msra.mxu0 0
        %1715 = vmatprep.subr.bf16.mxu0 0
        %1716 = vmatpush1.bf16.msra.mxu0 0
        %1717 = vmatprep.subr.bf16.mxu0 0
        %1718 = vmatpush1.bf16.msra.mxu0 0
        %1719 = vmatprep.subr.bf16.mxu0 0
        %1720 = vmatpush1.bf16.msra.mxu0 0
        %1721 = vmatprep.subr.bf16.mxu0 0
        %1722 = vmatpush1.bf16.msra.mxu0 0
        %1723 = vmatprep.subr.bf16.mxu0 0
        %1724 = vmatpush1.bf16.msra.mxu0 0
        %1725 = vmatprep.subr.bf16.mxu0 0
        %1726 = vmatpush1.bf16.msra.mxu0 0
        %1727 = vmatprep.subr.bf16.mxu0 0
        %1728 = vmatpush1.bf16.msra.mxu0 0
        %1729 = vmatprep.subr.bf16.mxu0 0
        %1730 = vmatpush1.bf16.msra.mxu0 0
        %1731 = vmatprep.subr.bf16.mxu0 0
        %1732 = vmatpush1.bf16.msra.mxu0 0
        %1733 = vmatprep.subr.bf16.mxu0 0
        %1734 = vmatpush1.bf16.msra.mxu0 0
        %1735 = vmatprep.subr.bf16.mxu0 0
        %1736 = vmatpush1.bf16.msra.mxu0 0
        %1737 = vmatprep.subr.bf16.mxu0 0
        %1738 = vmatpush1.bf16.msra.mxu0 0
        %1739 = vmatprep.mubr.bf16.mxu0 0
        %1740 = vmatmul.mubr.bf16.gmra.mrb[0].mxu0 %v1702
        %v1741 = vpop.f32.mrb[0].mxu0
        %v1742 = vadd.f32 0.0, %v1741
        %v1743 = vpop.f32.mrb[0].mxu0
        %v1744 = vpop.f32.mrb[0].mxu0
        %v1745 = vpop.f32.mrb[0].mxu0
        %1746 = vdwg.mxu0
        %1747 = vrot.lane.b32.xlu0 %v1524, 112
        %v1748 = vpop.permute.xlu0 %1747
        %1749 = vrot.lane.b32.xlu0 %v1524, 80
        %v1750 = vpop.permute.xlu0 %1749
        %v1752 = vsel %vm866, %v1748, 0
        %v1755 = vsel %vm866, %v1750, 0
        %1757 = vmatprep.subr.bf16.mxu0 0
        %1758 = vmatpush1.bf16.xpose.msra.mxu0 %v1755
        %1759 = vmatprep.subr.bf16.mxu0 0
        %1760 = vmatpush1.bf16.xpose.msra.mxu0 0
        %1761 = vmatprep.subr.bf16.mxu0 0
        %1762 = vmatpush1.bf16.xpose.msra.mxu0 0
        %1763 = vmatprep.subr.bf16.mxu0 0
        %1764 = vmatpush1.bf16.xpose.msra.mxu0 0
        %1765 = vmatprep.subr.bf16.mxu0 0
        %1766 = vmatpush1.bf16.xpose.msra.mxu0 0
        %1767 = vmatprep.subr.bf16.mxu0 0
        %1768 = vmatpush1.bf16.xpose.msra.mxu0 0
        %1769 = vmatprep.subr.bf16.mxu0 0
        %1770 = vmatpush1.bf16.xpose.msra.mxu0 0
        %1771 = vmatprep.subr.bf16.mxu0 0
        %1772 = vmatpush1.bf16.xpose.msra.mxu0 0
        %1773 = vmatprep.subr.bf16.mxu0 0
        %1774 = vmatpush1.bf16.xpose.msra.mxu0 0
        %1775 = vmatprep.subr.bf16.mxu0 0
        %1776 = vmatpush1.bf16.xpose.msra.mxu0 0
        %1777 = vmatprep.subr.bf16.mxu0 0
        %1778 = vmatpush1.bf16.xpose.msra.mxu0 0
        %1779 = vmatprep.subr.bf16.mxu0 0
        %1780 = vmatpush1.bf16.xpose.msra.mxu0 0
        %1781 = vmatprep.subr.bf16.mxu0 0
        %1782 = vmatpush1.bf16.xpose.msra.mxu0 0
        %1783 = vmatprep.subr.bf16.mxu0 0
        %1784 = vmatpush1.bf16.xpose.msra.mxu0 0
        %1785 = vmatprep.subr.bf16.mxu0 0
        %1786 = vmatpush1.bf16.xpose.msra.mxu0 0
        %1787 = vmatprep.subr.bf16.mxu0 0
        %1788 = vmatpush1.bf16.xpose.msra.mxu0 0
        %1789 = vmatprep.mubr.bf16.mxu0 0
        %1790 = vmatmul.mubr.bf16.gmra.mrb[0].mxu0 %v1752
        %v1791 = vpop.f32.mrb[0].mxu0
        %v1792 = vadd.f32 0.0, %v1791
        %v1793 = vpop.f32.mrb[0].mxu0
        %v1794 = vpop.f32.mrb[0].mxu0
        %v1795 = vpop.f32.mrb[0].mxu0
        %1796 = vdwg.mxu0
        %v1797 = vsel %vm1574, %v1792, -inf
        %1798 = vmax.xlane.f32.xlu0 %v1797
        %v1799 = vpop.xlane.xlu0 %1798
        %v1800 = vsub.f32 %v1792, %v1799
        %v1801 = vmul.f32 %v1800, 1.442695
        %v1802 = vpow.pop %v1801
        %v1803 = vsel %vm1574, %v1802, 0.0
        %1804 = vadd.xlane.f32.xlu0 %v1803
        %v1805 = vpop.xlane.xlu0 %1804
        %v1806 = vrcp.pop %v1805
        %v1807 = vmul.f32 %v1802, %v1806
        %v1808 = vpack.c.bf16 %v1807, %v1807
        %1809 = vrot.lane.b32.xlu0 %v1524, 48
        %v1810 = vpop.permute.xlu0 %1809
        %v1812 = vsel %vm1589, %v1808, 0
        %v1815 = vsel %vm1593, %v1810, 0
        %1817 = vmatprep.subr.bf16.mxu0 0
        %1818 = vmatpush1.bf16.msra.mxu0 %v1815
        %1819 = vmatprep.subr.bf16.mxu0 0
        %1820 = vmatpush1.bf16.msra.mxu0 0
        %1821 = vmatprep.subr.bf16.mxu0 0
        %1822 = vmatpush1.bf16.msra.mxu0 0
        %1823 = vmatprep.subr.bf16.mxu0 0
        %1824 = vmatpush1.bf16.msra.mxu0 0
        %1825 = vmatprep.subr.bf16.mxu0 0
        %1826 = vmatpush1.bf16.msra.mxu0 0
        %1827 = vmatprep.subr.bf16.mxu0 0
        %1828 = vmatpush1.bf16.msra.mxu0 0
        %1829 = vmatprep.subr.bf16.mxu0 0
        %1830 = vmatpush1.bf16.msra.mxu0 0
        %1831 = vmatprep.subr.bf16.mxu0 0
        %1832 = vmatpush1.bf16.msra.mxu0 0
        %1833 = vmatprep.subr.bf16.mxu0 0
        %1834 = vmatpush1.bf16.msra.mxu0 0
        %1835 = vmatprep.subr.bf16.mxu0 0
        %1836 = vmatpush1.bf16.msra.mxu0 0
        %1837 = vmatprep.subr.bf16.mxu0 0
        %1838 = vmatpush1.bf16.msra.mxu0 0
        %1839 = vmatprep.subr.bf16.mxu0 0
        %1840 = vmatpush1.bf16.msra.mxu0 0
        %1841 = vmatprep.subr.bf16.mxu0 0
        %1842 = vmatpush1.bf16.msra.mxu0 0
        %1843 = vmatprep.subr.bf16.mxu0 0
        %1844 = vmatpush1.bf16.msra.mxu0 0
        %1845 = vmatprep.subr.bf16.mxu0 0
        %1846 = vmatpush1.bf16.msra.mxu0 0
        %1847 = vmatprep.subr.bf16.mxu0 0
        %1848 = vmatpush1.bf16.msra.mxu0 0
        %1849 = vmatprep.mubr.bf16.mxu0 0
        %1850 = vmatmul.mubr.bf16.gmra.mrb[0].mxu0 %v1812
        %v1851 = vpop.f32.mrb[0].mxu0
        %v1852 = vadd.f32 0.0, %v1851
        %v1853 = vpop.f32.mrb[0].mxu0
        %v1854 = vpop.f32.mrb[0].mxu0
        %v1855 = vpop.f32.mrb[0].mxu0
        %1856 = vdwg.mxu0
        %1857 = vrot.lane.b32.xlu0 %v1524, 104
        %v1858 = vpop.permute.xlu0 %1857
        %1859 = vrot.lane.b32.xlu0 %v1524, 72
        %v1860 = vpop.permute.xlu0 %1859
        %v1862 = vsel %vm866, %v1858, 0
        %v1865 = vsel %vm866, %v1860, 0
        %1867 = vmatprep.subr.bf16.mxu0 0
        %1868 = vmatpush1.bf16.xpose.msra.mxu0 %v1865
        %1869 = vmatprep.subr.bf16.mxu0 0
        %1870 = vmatpush1.bf16.xpose.msra.mxu0 0
        %1871 = vmatprep.subr.bf16.mxu0 0
        %1872 = vmatpush1.bf16.xpose.msra.mxu0 0
        %1873 = vmatprep.subr.bf16.mxu0 0
        %1874 = vmatpush1.bf16.xpose.msra.mxu0 0
        %1875 = vmatprep.subr.bf16.mxu0 0
        %1876 = vmatpush1.bf16.xpose.msra.mxu0 0
        %1877 = vmatprep.subr.bf16.mxu0 0
        %1878 = vmatpush1.bf16.xpose.msra.mxu0 0
        %1879 = vmatprep.subr.bf16.mxu0 0
        %1880 = vmatpush1.bf16.xpose.msra.mxu0 0
        %1881 = vmatprep.subr.bf16.mxu0 0
        %1882 = vmatpush1.bf16.xpose.msra.mxu0 0
        %1883 = vmatprep.subr.bf16.mxu0 0
        %1884 = vmatpush1.bf16.xpose.msra.mxu0 0
        %1885 = vmatprep.subr.bf16.mxu0 0
        %1886 = vmatpush1.bf16.xpose.msra.mxu0 0
        %1887 = vmatprep.subr.bf16.mxu0 0
        %1888 = vmatpush1.bf16.xpose.msra.mxu0 0
        %1889 = vmatprep.subr.bf16.mxu0 0
        %1890 = vmatpush1.bf16.xpose.msra.mxu0 0
        %1891 = vmatprep.subr.bf16.mxu0 0
        %1892 = vmatpush1.bf16.xpose.msra.mxu0 0
        %1893 = vmatprep.subr.bf16.mxu0 0
        %1894 = vmatpush1.bf16.xpose.msra.mxu0 0
        %1895 = vmatprep.subr.bf16.mxu0 0
        %1896 = vmatpush1.bf16.xpose.msra.mxu0 0
        %1897 = vmatprep.subr.bf16.mxu0 0
        %1898 = vmatpush1.bf16.xpose.msra.mxu0 0
        %1899 = vmatprep.mubr.bf16.mxu0 0
        %1900 = vmatmul.mubr.bf16.gmra.mrb[0].mxu0 %v1862
        %v1901 = vpop.f32.mrb[0].mxu0
        %v1902 = vadd.f32 0.0, %v1901
        %v1903 = vpop.f32.mrb[0].mxu0
        %v1904 = vpop.f32.mrb[0].mxu0
        %v1905 = vpop.f32.mrb[0].mxu0
        %1906 = vdwg.mxu0
        %v1907 = vsel %vm1574, %v1902, -inf
        %1908 = vmax.xlane.f32.xlu0 %v1907
        %v1909 = vpop.xlane.xlu0 %1908
        %v1910 = vsub.f32 %v1902, %v1909
        %v1911 = vmul.f32 %v1910, 1.442695
        %v1912 = vpow.pop %v1911
        %v1913 = vsel %vm1574, %v1912, 0.0
        %1914 = vadd.xlane.f32.xlu0 %v1913
        %v1915 = vpop.xlane.xlu0 %1914
        %v1916 = vrcp.pop %v1915
        %v1917 = vmul.f32 %v1912, %v1916
        %v1918 = vpack.c.bf16 %v1917, %v1917
        %1919 = vrot.lane.b32.xlu0 %v1524, 40
        %v1920 = vpop.permute.xlu0 %1919
        %v1922 = vsel %vm1589, %v1918, 0
        %v1925 = vsel %vm1593, %v1920, 0
        %1927 = vmatprep.subr.bf16.mxu0 0
        %1928 = vmatpush1.bf16.msra.mxu0 %v1925
        %1929 = vmatprep.subr.bf16.mxu0 0
        %1930 = vmatpush1.bf16.msra.mxu0 0
        %1931 = vmatprep.subr.bf16.mxu0 0
        %1932 = vmatpush1.bf16.msra.mxu0 0
        %1933 = vmatprep.subr.bf16.mxu0 0
        %1934 = vmatpush1.bf16.msra.mxu0 0
        %1935 = vmatprep.subr.bf16.mxu0 0
        %1936 = vmatpush1.bf16.msra.mxu0 0
        %1937 = vmatprep.subr.bf16.mxu0 0
        %1938 = vmatpush1.bf16.msra.mxu0 0
        %1939 = vmatprep.subr.bf16.mxu0 0
        %1940 = vmatpush1.bf16.msra.mxu0 0
        %1941 = vmatprep.subr.bf16.mxu0 0
        %1942 = vmatpush1.bf16.msra.mxu0 0
        %1943 = vmatprep.subr.bf16.mxu0 0
        %1944 = vmatpush1.bf16.msra.mxu0 0
        %1945 = vmatprep.subr.bf16.mxu0 0
        %1946 = vmatpush1.bf16.msra.mxu0 0
        %1947 = vmatprep.subr.bf16.mxu0 0
        %1948 = vmatpush1.bf16.msra.mxu0 0
        %1949 = vmatprep.subr.bf16.mxu0 0
        %1950 = vmatpush1.bf16.msra.mxu0 0
        %1951 = vmatprep.subr.bf16.mxu0 0
        %1952 = vmatpush1.bf16.msra.mxu0 0
        %1953 = vmatprep.subr.bf16.mxu0 0
        %1954 = vmatpush1.bf16.msra.mxu0 0
        %1955 = vmatprep.subr.bf16.mxu0 0
        %1956 = vmatpush1.bf16.msra.mxu0 0
        %1957 = vmatprep.subr.bf16.mxu0 0
        %1958 = vmatpush1.bf16.msra.mxu0 0
        %1959 = vmatprep.mubr.bf16.mxu0 0
        %1960 = vmatmul.mubr.bf16.gmra.mrb[0].mxu0 %v1922
        %v1961 = vpop.f32.mrb[0].mxu0
        %v1962 = vadd.f32 0.0, %v1961
        %v1963 = vpop.f32.mrb[0].mxu0
        %v1964 = vpop.f32.mrb[0].mxu0
        %v1965 = vpop.f32.mrb[0].mxu0
        %1966 = vdwg.mxu0
        %1968 = vrot.lane.b32.xlu0 %v1742, 8
        %v1969 = vpop.permute.xlu0 %1968
        %1972 = vrot.lane.b32.xlu0 %v1852, 16
        %v1973 = vpop.permute.xlu0 %1972
        %1976 = vrot.lane.b32.xlu0 %v1962, 24
        %v1977 = vpop.permute.xlu0 %1976
        %v1979 = vsel %vm866, %v1632, %v1969
        %v1980 = vsel %vm1317, %v1979, %v1973
        %v1981 = vsel %vm1319, %v1980, %v1977
        %v1982 = vpack.c.bf16 %v1981, %v1981
        %v1984 = vlaneseq
        %v1985 = vshrl.u32 %v1984, 7
        %v1986 = vsub.s32 0, %v1985
        %v1987 = vrot.slane %v777, %v1986
        %v1993 = vunpack.c.l.b16 %v772
        %v1994 = vunpack.c.l.b16 %v773
        %v1995 = vunpack.c.l.b16 %v774
        %v1996 = vunpack.c.l.b16 %v775
        %v1997 = vpack.c.b16 %v1994, %v1993
        %v1998 = vpack.c.b16 %v1996, %v1995
        %v2002 = vsel %vm812, %v1982, 0
        %2004 = vmatprep.subr.bf16.mxu0 0
        %2005 = vmatpush1.bf16.msra.mxu0 %v1997
        %2006 = vmatprep.subr.bf16.mxu0 0
        %2007 = vmatpush1.bf16.msra.mxu0 %v1998
        %2008 = vmatprep.subr.bf16.mxu0 0
        %2009 = vmatpush1.bf16.msra.mxu0 0
        %2010 = vmatprep.subr.bf16.mxu0 0
        %2011 = vmatpush1.bf16.msra.mxu0 0
        %2012 = vmatprep.subr.bf16.mxu0 0
        %2013 = vmatpush1.bf16.msra.mxu0 0
        %2014 = vmatprep.subr.bf16.mxu0 0
        %2015 = vmatpush1.bf16.msra.mxu0 0
        %2016 = vmatprep.subr.bf16.mxu0 0
        %2017 = vmatpush1.bf16.msra.mxu0 0
        %2018 = vmatprep.subr.bf16.mxu0 0
        %2019 = vmatpush1.bf16.msra.mxu0 0
        %2020 = vmatprep.subr.bf16.mxu0 0
        %2021 = vmatpush1.bf16.msra.mxu0 0
        %2022 = vmatprep.subr.bf16.mxu0 0
        %2023 = vmatpush1.bf16.msra.mxu0 0
        %2024 = vmatprep.subr.bf16.mxu0 0
        %2025 = vmatpush1.bf16.msra.mxu0 0
        %2026 = vmatprep.subr.bf16.mxu0 0
        %2027 = vmatpush1.bf16.msra.mxu0 0
        %2028 = vmatprep.subr.bf16.mxu0 0
        %2029 = vmatpush1.bf16.msra.mxu0 0
        %2030 = vmatprep.subr.bf16.mxu0 0
        %2031 = vmatpush1.bf16.msra.mxu0 0
        %2032 = vmatprep.subr.bf16.mxu0 0
        %2033 = vmatpush1.bf16.msra.mxu0 0
        %2034 = vmatprep.subr.bf16.mxu0 0
        %2035 = vmatpush1.bf16.msra.mxu0 0
        %2036 = vmatprep.mubr.bf16.mxu0 0
        %2037 = vmatmul.mubr.bf16.gmra.mrb[0].mxu0 %v2002
        %v2038 = vpop.f32.mrb[0].mxu0
        %v2039 = vadd.f32 %v1987, %v2038
        %v2040 = vpop.f32.mrb[0].mxu0
        %v2041 = vpop.f32.mrb[0].mxu0
        %v2042 = vpop.f32.mrb[0].mxu0
        %2043 = vdwg.mxu0
        %vm2044 = vcmask 259072
        %v2045 = vsel %vm2044, %v2039, 0.0
        %v2046 = vrot.slane %v2045, 4
        %v2047 = vadd.f32 %v2045, %v2046
        %v2048 = vrot.slane %v2047, 2
        %v2049 = vadd.f32 %v2047, %v2048
        %v2050 = vrot.slane %v2049, 1
        %v2051 = vadd.f32 %v2049, %v2050
        %v2052 = vrcp.pop 6.0
        %v2053 = vmul.f32 %v2051, %v2052
        %2055 = vrot.lane.b32.xlu0 %v2053, 32
        %v2056 = vpop.permute.xlu0 %2055
        %v2058 = vsel %vm812, %v1461, %v2056
        %v2059 = vpack.c.bf16 %v2058, %v2058
        %v2068 = vunpack.c.l.b16 %v778
        %v2069 = vunpack.c.l.b16 %v779
        %v2070 = vunpack.c.l.b16 %v780
        %v2071 = vunpack.c.l.b16 %v781
        %v2072 = vunpack.c.l.b16 %v782
        %v2073 = vunpack.c.l.b16 %v783
        %v2074 = vunpack.c.l.b16 %v784
        %v2075 = vunpack.c.l.b16 %v785
        %v2076 = vpack.c.b16 %v2069, %v2068
        %v2077 = vpack.c.b16 %v2071, %v2070
        %v2078 = vpack.c.b16 %v2073, %v2072
        %v2079 = vpack.c.b16 %v2075, %v2074
        %vm2084 = vcmask 523264
        %v2086 = vsel %vm2084, %v2059, 0
        %2088 = vmatprep.subr.bf16.mxu0 0
        %2089 = vmatpush1.bf16.msra.mxu0 %v2076
        %2090 = vmatprep.subr.bf16.mxu0 0
        %2091 = vmatpush1.bf16.msra.mxu0 %v2077
        %2092 = vmatprep.subr.bf16.mxu0 0
        %2093 = vmatpush1.bf16.msra.mxu0 %v2078
        %2094 = vmatprep.subr.bf16.mxu0 0
        %2095 = vmatpush1.bf16.msra.mxu0 %v2079
        %2096 = vmatprep.subr.bf16.mxu0 0
        %2097 = vmatpush1.bf16.msra.mxu0 0
        %2098 = vmatprep.subr.bf16.mxu0 0
        %2099 = vmatpush1.bf16.msra.mxu0 0
        %2100 = vmatprep.subr.bf16.mxu0 0
        %2101 = vmatpush1.bf16.msra.mxu0 0
        %2102 = vmatprep.subr.bf16.mxu0 0
        %2103 = vmatpush1.bf16.msra.mxu0 0
        %2104 = vmatprep.subr.bf16.mxu0 0
        %2105 = vmatpush1.bf16.msra.mxu0 0
        %2106 = vmatprep.subr.bf16.mxu0 0
        %2107 = vmatpush1.bf16.msra.mxu0 0
        %2108 = vmatprep.subr.bf16.mxu0 0
        %2109 = vmatpush1.bf16.msra.mxu0 0
        %2110 = vmatprep.subr.bf16.mxu0 0
        %2111 = vmatpush1.bf16.msra.mxu0 0
        %2112 = vmatprep.subr.bf16.mxu0 0
        %2113 = vmatpush1.bf16.msra.mxu0 0
        %2114 = vmatprep.subr.bf16.mxu0 0
        %2115 = vmatpush1.bf16.msra.mxu0 0
        %2116 = vmatprep.subr.bf16.mxu0 0
        %2117 = vmatpush1.bf16.msra.mxu0 0
        %2118 = vmatprep.subr.bf16.mxu0 0
        %2119 = vmatpush1.bf16.msra.mxu0 0
        %2120 = vmatprep.mubr.bf16.mxu0 0
        %2121 = vmatmul.mubr.bf16.gmra.mrb[0].mxu0 %v2086
        %v2122 = vpop.f32.mrb[0].mxu0
        %v2123 = vadd.f32 0.0, %v2122
        %v2124 = vpop.f32.mrb[0].mxu0
        %v2125 = vpop.f32.mrb[0].mxu0
        %v2126 = vpop.f32.mrb[0].mxu0
        %2127 = vdwg.mxu0
        %v2128 = vpack.c.bf16 %v749, %v749
        %v2129 = vpack.c.bf16 %v750, %v750
        %v2130 = vpack.c.bf16 %v751, %v751
        %v2131 = vpack.c.bf16 %v752, %v752
        %v2132 = vpack.c.bf16 %v753, %v753
        %v2138 = vunpack.c.l.b16 %v2128
        %v2139 = vunpack.c.l.b16 %v2129
        %v2140 = vunpack.c.l.b16 %v2130
        %v2141 = vunpack.c.l.b16 %v2131
        %v2142 = vunpack.c.l.b16 %v2132
        %vm2143 = vcmask 1041409
        %v2144 = vsel %vm2143, %v2139, %v2138
        %vm2145 = vcmask 1042434
        %v2146 = vsel %vm2145, %v2140, %v2144
        %vm2147 = vcmask 1043459
        %v2148 = vsel %vm2147, %v2141, %v2146
        %vm2149 = vcmask 1044484
        %v2150 = vsel %vm2149, %v2142, %v2148
        %v2151 = vpack.c.b16 %v2150, %v2150
        %v2156 = vunpack.c.l.b16 %v786
        %v2157 = vunpack.c.l.b16 %v787
        %v2158 = vunpack.c.l.b16 %v788
        %v2159 = vunpack.c.l.b16 %v789
        %v2160 = vpack.c.b16 %v2157, %v2156
        %v2161 = vpack.c.b16 %v2159, %v2158
        %v2165 = vsel %vm812, %v2151, 0
        %2167 = vmatprep.subr.bf16.mxu0 0
        %2168 = vmatpush1.bf16.msra.mxu0 %v2160
        %2169 = vmatprep.subr.bf16.mxu0 0
        %2170 = vmatpush1.bf16.msra.mxu0 %v2161
        %2171 = vmatprep.subr.bf16.mxu0 0
        %2172 = vmatpush1.bf16.msra.mxu0 0
        %2173 = vmatprep.subr.bf16.mxu0 0
        %2174 = vmatpush1.bf16.msra.mxu0 0
        %2175 = vmatprep.subr.bf16.mxu0 0
        %2176 = vmatpush1.bf16.msra.mxu0 0
        %2177 = vmatprep.subr.bf16.mxu0 0
        %2178 = vmatpush1.bf16.msra.mxu0 0
        %2179 = vmatprep.subr.bf16.mxu0 0
        %2180 = vmatpush1.bf16.msra.mxu0 0
        %2181 = vmatprep.subr.bf16.mxu0 0
        %2182 = vmatpush1.bf16.msra.mxu0 0
        %2183 = vmatprep.subr.bf16.mxu0 0
        %2184 = vmatpush1.bf16.msra.mxu0 0
        %2185 = vmatprep.subr.bf16.mxu0 0
        %2186 = vmatpush1.bf16.msra.mxu0 0
        %2187 = vmatprep.subr.bf16.mxu0 0
        %2188 = vmatpush1.bf16.msra.mxu0 0
        %2189 = vmatprep.subr.bf16.mxu0 0
        %2190 = vmatpush1.bf16.msra.mxu0 0
        %2191 = vmatprep.subr.bf16.mxu0 0
        %2192 = vmatpush1.bf16.msra.mxu0 0
        %2193 = vmatprep.subr.bf16.mxu0 0
        %2194 = vmatpush1.bf16.msra.mxu0 0
        %2195 = vmatprep.subr.bf16.mxu0 0
        %2196 = vmatpush1.bf16.msra.mxu0 0
        %2197 = vmatprep.subr.bf16.mxu0 0
        %2198 = vmatpush1.bf16.msra.mxu0 0
        %2199 = vmatprep.mubr.bf16.mxu0 0
        %2200 = vmatmul.mubr.bf16.gmra.mrb[0].mxu0 %v2165
        %v2201 = vpop.f32.mrb[0].mxu0
        %v2202 = vadd.f32 0.0, %v2201
        %v2203 = vpop.f32.mrb[0].mxu0
        %v2204 = vpop.f32.mrb[0].mxu0
        %v2205 = vpop.f32.mrb[0].mxu0
        %2206 = vdwg.mxu0
        %v2207 = vlaneseq
        %v2208 = vshrl.u32 %v2207, 7
        %v2209 = vsub.s32 0, %v2208
        %v2210 = vrot.slane %v2123, %v2209
        %v2211 = vadd.f32 %v2202, %v2210
        %v2212 = vld [vmem:[%s12] sm:$0x1]
        %v2214 = vlaneseq
        %v2215 = vshrl.u32 %v2214, 7
        %v2216 = vsub.s32 0, %v2215
        %v2217 = vrot.slane %v2212, %v2216
        %v2219 = vadd.f32 %v2211, %v2217
        %v2220 = vmax.f32 %v2219, 0.0
        %v2221 = vld [vmem:[%s13] sm:$0x1]
        %v2223 = vlaneseq
        %v2224 = vshrl.u32 %v2223, 7
        %v2225 = vsub.s32 0, %v2224
        %v2226 = vrot.slane %v2221, %v2225
        %v2228 = vmul.f32 %v2220, %v2226
        %vm2229 = vcmask 258048
        %v2230 = vsel %vm2229, %v2228, 0.0
        %2231 = vadd.xlane.f32.xlu0 %v2230
        %v2232 = vpop.xlane.xlu0 %2231
        %v2233 = vld [vmem:[%s587] sm:$0x1]
        %v2235 = vlaneseq
        %v2236 = vshrl.u32 %v2235, 7
        %v2237 = vsub.s32 0, %v2236
        %v2238 = vrot.slane %v2232, %v2237
        %v2239 = vlaneseq
        %v2240 = vshrl.u32 %v2239, 7
        %v2241 = vsub.s32 1, %v2240
        %v2242 = vrot.slane %v2232, %v2241
        %v2243 = vlaneseq
        %v2244 = vshrl.u32 %v2243, 7
        %v2245 = vsub.s32 2, %v2244
        %v2246 = vrot.slane %v2232, %v2245
        %v2247 = vlaneseq
        %v2248 = vshrl.u32 %v2247, 7
        %v2249 = vsub.s32 3, %v2248
        %v2250 = vrot.slane %v2232, %v2249
        %v2251 = vlaneseq
        %v2252 = vshrl.u32 %v2251, 7
        %v2253 = vsub.s32 4, %v2252
        %v2254 = vrot.slane %v2232, %v2253
        %v2255 = vcombine.low %v2238, %v2242
        %v2256 = vcombine.low %v2246, %v2250
        %v2258 = vunpack.c.l.s4 1966171168
        %v2259 = vunpack.c.0.s8 %v2258
        %v2260 = vlaneseq
        %v2261 = vshrl.u32 %v2260, 7
        %v2262 = vsub.s32 %v2259, %v2261
        %v2263 = vrot.slane %v2255, %v2262
        %v2265 = vunpack.c.l.s4 1966171168
        %v2266 = vunpack.c.0.s8 %v2265
        %v2267 = vlaneseq
        %v2268 = vshrl.u32 %v2267, 7
        %v2269 = vsub.s32 %v2266, %v2268
        %v2270 = vrot.slane %v2256, %v2269
        %v2272 = vunpack.c.l.s4 1966171168
        %v2273 = vunpack.c.0.s8 %v2272
        %v2274 = vlaneseq
        %v2275 = vshrl.u32 %v2274, 7
        %v2276 = vsub.s32 %v2273, %v2275
        %v2277 = vrot.slane %v2254, %v2276
        %v2278 = vcombine.low %v2263, %v2270
        %v2280 = vunpack.c.l.s4 1966171168
        %v2281 = vunpack.c.0.s8 %v2280
        %v2282 = vlaneseq
        %v2283 = vshrl.u32 %v2282, 7
        %v2284 = vsub.s32 %v2281, %v2283
        %v2285 = vrot.slane %v2278, %v2284
        %v2287 = vunpack.c.l.s4 1966171168
        %v2288 = vunpack.c.0.s8 %v2287
        %v2289 = vlaneseq
        %v2290 = vshrl.u32 %v2289, 7
        %v2291 = vsub.s32 %v2288, %v2290
        %v2292 = vrot.slane %v2277, %v2291
        %v2293 = vcombine.low %v2285, %v2292
        %2294 = vset.pattern.permute.xlu0 0
        %2295 = vperm.xlu0 %2294, %v2293
        %v2296 = vpop.permute.xlu0 %2295
        %v2297 = vlaneseq
        %v2298 = vand.u32 %v2297, 127
        %v2299 = vlaneseq
        %v2300 = vshrl.u32 %v2299, 7
        %v2301 = vsub.s32 %v2298, %v2300
        %v2302 = vrot.slane %v2296, %v2301
        %v2304 = vunpack.c.l.s4 1966171168
        %v2305 = vunpack.c.0.s8 %v2304
        %v2306 = vlaneseq
        %v2307 = vshrl.u32 %v2306, 7
        %v2308 = vsub.s32 %v2305, %v2307
        %v2309 = vrot.slane %v2302, %v2308
        %v2311 = vunpack.c.l.s4 1966171168
        %v2312 = vunpack.c.0.s8 %v2311
        %v2313 = vlaneseq
        %v2314 = vshrl.u32 %v2313, 7
        %v2315 = vsub.s32 %v2312, %v2314
        %v2316 = vrot.slane %v2309, %v2315
        %v2318 = vmul.f32 %v2233, %v2316
        %v2319 = vld [vmem:[#allocation2] sm:$0x1]
        %2321 = vset.pattern.permute.xlu0 0
        %2322 = vperm.xlu0 %2321, %v2319
        %v2323 = vpop.permute.xlu0 %2322
        %v2325 = vlaneseq
        %v2326 = vshrl.u32 %v2325, 7
        %v2327 = vsub.s32 0, %v2326
        %v2328 = vrot.slane %v2323, %v2327
        %v2329 = vadd.f32 %v2318, %v2328
        %v2330 = vmul.f32 %v2329, %v2233
        %vm2331 = vcmask 32768
        %2332 = vst.msk [vmem:[%s574] sm:$0x1] %vm2331, %v2330
        %s2333 = sand.u32 %s387, 1
        %s2334 = scalar_lea.sflag [#allocation5], %s2333
        %s2335 = sand.u32 %s387, 1
        %s2336 = scalar_lea.vmem [#allocation6], %s2335
        // Predicated region
        $region85: #{tpu_custom_call.1} parent=79 // pred_check
          %p2337 = pneg %p397
        $region86: #{tpu_custom_call.1} parent=79 // pred_check_branch
          %2339 = sbr.rel (%p2337) target = $region88
        $region87: #{tpu_custom_call.1} parent=79 // pred_region
          %s2341 = ssub.s32 16, 16
          %2342 = vsyncadd %s2334, %s2341
          %s2343 = smul.addr %s34, 16
          %s2344 = scalar_lea.hbm %s15, %s2343
          %s2346 = sshll.u32 %s2336, 4
          %s2347 = int_to_ptr.vmem [resolvable:$true] %s2346
          %2349 = dma.vmem_to_hbm [thread:$0]  %s2347, 16, %s2344, %s2334
        $region88: #{tpu_custom_call.1} parent=79 // pred_fallthru
          _
      $region80: #{tpu_custom_call.1} parent=5 // pred_fallthru
        _
      %p2350 = scmp.le.s32.totalorder 2, %s29
      // Predicated region
      $region89: #{tpu_custom_call.1} parent=5 // pred_check
        %p2351 = pneg %p2350
      $region90: #{tpu_custom_call.1} parent=5 // pred_check_branch
        %2353 = sbr.rel (%p2351) target = $region92
      $region91: #{tpu_custom_call.1} parent=5 // pred_region
        %s2354 = ssub.s32 %s29, 2
        // Predicated region
        $region93: #{tpu_custom_call.1} parent=91 // pred_check
          %p2355 = pneg %p403
        $region94: #{tpu_custom_call.1} parent=91 // pred_check_branch
          %2357 = sbr.rel (%p2355) target = $region96
        $region95: #{tpu_custom_call.1} parent=91 // pred_region
          %s2358 = sand.u32 %s388, 1
          %s2359 = scalar_lea.sflag [#allocation5], %s2358
          %s2360 = sand.u32 %s388, 1
          %s2361 = scalar_lea.vmem [#allocation6], %s2360
          %2362 = dma.done %s2359, 16
        $region96: #{tpu_custom_call.1} parent=91 // pred_fallthru
          _
      $region92: #{tpu_custom_call.1} parent=5 // pred_fallthru
        _
    $region6: #{tpu_custom_call.1} parent=1 // loop_footer
      %s33 = sadd.s32 1, %s29
    $region7: #{tpu_custom_call.1} parent=1 // loop_footer_branch
      %28 = sbr.rel target = $region3
    $region8: #{tpu_custom_call.1} parent=1 // loop_exit
      _
    %2363 = vsyncpa [#allocation4], 1
    %s2364 = scalar_lea.sflag [#allocation4], 1
    %2365 = vsyncpa %s2364, 1
    %2366 = vsyncpa [#allocation5], 1
    %s2367 = scalar_lea.sflag [#allocation5], 1
    %2368 = vsyncpa %s2367, 1

</llo_original>
